<compile_context>
chip_gen: v7x
topology: tpu7x:2x2x1
jax: 0.10.0
libtpu: 0.0.40
codegen_flags: <defaults>
</compile_context>

<pallas_src>
import jax
import jax.numpy as jnp
from jax import lax
from jax.experimental import pallas as pl
from jax.experimental.pallas import tpu as pltpu


# ------------------------------------------------------------------
# padding helpers (weights are padded once, outside the hot path)
# ------------------------------------------------------------------
def _round_up(x, m):
    return ((x + m - 1) // m) * m


def _pad2d(x, rows, cols):
    return jnp.pad(x, ((0, rows - x.shape[0]), (0, cols - x.shape[1])))


def _pad_gru(w, h_in, h_pad, in_pad):
    """(in, 3*h_in) gate-packed [r,z,n] -> (in_pad, 3*h_pad), each gate block zero-padded."""
    parts = [_pad2d(w[:, g * h_in:(g + 1) * h_in], in_pad, h_pad) for g in range(3)]
    return jnp.concatenate(parts, axis=1)


# ------------------------------------------------------------------
# Single fused kernel: image fc+tanh -> GRU -> q fc+tanh -> MLB fusion -> head
# ------------------------------------------------------------------
def abstract_noatt_kernel(
    flat_v_ref,                     # (Bp, Fp)      f32
    q_flat_ref,                     # (T*Bp, Ep)    f32  (time-major, flattened)
    w_img_ref, b_img_ref,           # (Fp, Vp) bf16, (1, Vp) f32
    w_ih_ref, w_hh_ref,             # (Ep, 3Qp) bf16, (Qp, 3Qp) bf16
    b_ih_ref, b_hh_ref,             # (1, 3Qp) f32 each
    w_qfc_ref, b_qfc_ref,           # (Qp, Qp) bf16, (1, Qp) f32
    w_vh_ref, b_vh_ref,             # (Vp, Hp) bf16, (1, Hp) f32
    w_qh_ref, b_qh_ref,             # (Qp, Hp) bf16, (1, Hp) f32
    w_mlp_ref, b_mlp_ref,           # (Hp, Ap) bf16, (1, Ap) f32
    o_ref,                          # (Bp, Ap)      f32
    gi_scratch,                     # (T*Bp, 3Qp)   f32  VMEM scratch
):
    bf16, f32 = jnp.bfloat16, jnp.float32
    Bp = flat_v_ref.shape[0]
    Qp = w_hh_ref.shape[0]
    T = q_flat_ref.shape[0] // Bp

    # ---- ImageEncoder.fc : Linear(F, dim_v) + Tanh ----
    v = jnp.tanh(
        jnp.dot(flat_v_ref[...].astype(bf16), w_img_ref[...],
                preferred_element_type=f32) + b_img_ref[...])

    # ---- GRU input projection for ALL timesteps, hoisted out of the loop ----
    gi_scratch[...] = (
        jnp.dot(q_flat_ref[...].astype(bf16), w_ih_ref[...],
                preferred_element_type=f32) + b_ih_ref[...])

    whh = w_hh_ref[...]
    bhh = b_hh_ref[...]

    # ---- recurrent loop: only h @ W_hh per step (PyTorch gate order [r,z,n]) ----
    def gru_step(t, h):
        row0 = pl.multiple_of(t * Bp, Bp)
        gi = gi_scratch[pl.ds(row0, Bp), :]                              # (Bp, 3Qp)
        gh = jnp.dot(h.astype(bf16), whh, preferred_element_type=f32) + bhh
        i_r, i_z, i_n = gi[:, :Qp], gi[:, Qp:2 * Qp], gi[:, 2 * Qp:]
        h_r, h_z, h_n = gh[:, :Qp], gh[:, Qp:2 * Qp], gh[:, 2 * Qp:]
        r = jax.nn.sigmoid(i_r + h_r)
        z = jax.nn.sigmoid(i_z + h_z)
        n = jnp.tanh(i_n + r * h_n)
        return (1.0 - z) * n + z * h

    h = lax.fori_loop(0, T, gru_step, jnp.zeros((Bp, Qp), f32), unroll=True)

    # ---- QuestionEmbedding.fc + Tanh ----
    q_enc = jnp.tanh(
        jnp.dot(h.astype(bf16), w_qfc_ref[...],
                preferred_element_type=f32) + b_qfc_ref[...])

    # ---- MLB-style fusion (Hadamard of projected modalities) + classifier head ----
    xv = jnp.tanh(jnp.dot(v.astype(bf16), w_vh_ref[...],
                          preferred_element_type=f32) + b_vh_ref[...])
    xq = jnp.tanh(jnp.dot(q_enc.astype(bf16), w_qh_ref[...],
                          preferred_element_type=f32) + b_qh_ref[...])
    x = xv * xq
    o_ref[...] = (jnp.dot(x.astype(bf16), w_mlp_ref[...],
                          preferred_element_type=f32) + b_mlp_ref[...])


def _fused_call(flat_v, q_flat, p, *, Bp, T):
    d = p["dims"]
    args = (flat_v, q_flat,
            p["w_img"], p["b_img"],
            p["w_ih"], p["w_hh"], p["b_ih"], p["b_hh"],
            p["w_qfc"], p["b_qfc"],
            p["w_vh"], p["b_vh"], p["w_qh"], p["b_qh"],
            p["w_mlp"], p["b_mlp"])
    return pl.pallas_call(
        abstract_noatt_kernel,
        out_shape=jax.ShapeDtypeStruct((Bp, d["Ap"]), jnp.float32),
        in_specs=[pl.BlockSpec(memory_space=pltpu.MemorySpace.VMEM)
                  for _ in range(len(args))],
        out_specs=pl.BlockSpec(memory_space=pltpu.MemorySpace.VMEM),
        scratch_shapes=[pltpu.VMEM((T * Bp, 3 * d["Qp"]), jnp.float32)],
    )(*args)


# ------------------------------------------------------------------
# Parameter preparation: pad to (8, 128)-aligned tiles, weights -> bf16
# ------------------------------------------------------------------
def prepare_params(raw, *, F, dim_v, dim_q, dim_h, E, ans_vocab):
    Fp = _round_up(F, 128)
    Vp = _round_up(dim_v, 128)
    Qp = _round_up(dim_q, 128)
    Hp = _round_up(dim_h, 128)
    Ep = _round_up(E, 128)
    Ap = _round_up(ans_vocab, 128)
    bf16 = jnp.bfloat16
    return {
        "dims": dict(F=F, Fp=Fp, Vp=Vp, Qp=Qp, Hp=Hp, Ep=Ep, Ap=Ap,
                     ans_vocab=ans_vocab),
        "emb_tbl": _pad2d(raw["emb_tbl"], raw["emb_tbl"].shape[0], Ep),
        "w_img": _pad2d(raw["w_img"], Fp, Vp).astype(bf16),
        "b_img": _pad2d(raw["b_img"], 1, Vp),
        "w_ih": _pad_gru(raw["w_ih"], dim_q, Qp, Ep).astype(bf16),
        "w_hh": _pad_gru(raw["w_hh"], dim_q, Qp, Qp).astype(bf16),
        "b_ih": _pad_gru(raw["b_ih"], dim_q, Qp, 1),
        "b_hh": _pad_gru(raw["b_hh"], dim_q, Qp, 1),
        "w_qfc": _pad2d(raw["w_qfc"], Qp, Qp).astype(bf16),
        "b_qfc": _pad2d(raw["b_qfc"], 1, Qp),
        "w_vh": _pad2d(raw["w_vh"], Vp, Hp).astype(bf16),
        "b_vh": _pad2d(raw["b_vh"], 1, Hp),
        "w_qh": _pad2d(raw["w_qh"], Qp, Hp).astype(bf16),
        "b_qh": _pad2d(raw["b_qh"], 1, Hp),
        "w_mlp": _pad2d(raw["w_mlp"], Hp, Ap).astype(bf16),
        "b_mlp": _pad2d(raw["b_mlp"], 1, Ap),
    }


# ------------------------------------------------------------------
# Full forward (glue: flatten / embedding gather / padding stay in XLA)
# ------------------------------------------------------------------
def abstract_noatt_forward(feat_v, tokens, params):
    d = params["dims"]
    B = feat_v.shape[0]
    T = tokens.shape[1]
    Bp = _round_up(max(B, 8), 8)

    # ImageEncoder (post-backbone): flatten NCHW -> (B, F), pad to tile shapes
    flat_v = feat_v.reshape(B, -1)
    flat_v = _pad2d(flat_v, Bp, d["Fp"])

    # word embedding gather -> time-major (T, Bp, Ep) -> flattened (T*Bp, Ep)
    tok_p = jnp.pad(tokens, ((0, Bp - B), (0, 0)))
    q_emb = jnp.take(params["emb_tbl"], tok_p, axis=0)            # (Bp, T, Ep)
    q_flat = jnp.transpose(q_emb, (1, 0, 2)).reshape(T * Bp, d["Ep"])

    out_p = _fused_call(flat_v, q_flat, params, Bp=Bp, T=T)       # (Bp, Ap)
    return out_p[:B, :d["ans_vocab"]]


if __name__ == "__main__":
    key = jax.random.PRNGKey(0)
    ks = jax.random.split(key, 20)

    # small shapes consistent with the module's forward
    B = 2
    C, Hs, Ws = 4, 16, 16            # stand-in CNN feature map (NCHW)
    F = C * Hs * Ws                  # 1024
    dim_v = dim_q = dim_h = 32
    E, T = 16, 8                     # word embedding size, question length
    q_vocab, ans_vocab = 50, 16

    s = 0.1
    raw = {
        "w_img": s * jax.random.normal(ks[2], (F, dim_v), jnp.float32),
        "b_img": s * jax.random.normal(ks[3], (1, dim_v), jnp.float32),
        "emb_tbl": s * jax.random.normal(ks[4], (q_vocab, E), jnp.float32),
        # GRU weights, (in, 3H) == PyTorch weight_ih_l0.T, gate order [r, z, n]
        "w_ih": s * jax.random.normal(ks[5], (E, 3 * dim_q), jnp.float32),
        "w_hh": s * jax.random.normal(ks[6], (dim_q, 3 * dim_q), jnp.float32),
        "b_ih": s * jax.random.normal(ks[7], (1, 3 * dim_q), jnp.float32),
        "b_hh": s * jax.random.normal(ks[8], (1, 3 * dim_q), jnp.float32),
        "w_qfc": s * jax.random.normal(ks[9], (dim_q, dim_q), jnp.float32),
        "b_qfc": s * jax.random.normal(ks[10], (1, dim_q), jnp.float32),
        # fusion projections + classifier head
        "w_vh": s * jax.random.normal(ks[11], (dim_v, dim_h), jnp.float32),
        "b_vh": s * jax.random.normal(ks[12], (1, dim_h), jnp.float32),
        "w_qh": s * jax.random.normal(ks[13], (dim_q, dim_h), jnp.float32),
        "b_qh": s * jax.random.normal(ks[14], (1, dim_h), jnp.float32),
        "w_mlp": s * jax.random.normal(ks[15], (dim_h, ans_vocab), jnp.float32),
        "b_mlp": s * jax.random.normal(ks[16], (1, ans_vocab), jnp.float32),
    }
    params = prepare_params(raw, F=F, dim_v=dim_v, dim_q=dim_q, dim_h=dim_h,
                            E=E, ans_vocab=ans_vocab)

    feat_v = jax.random.normal(ks[0], (B, C, Hs, Ws), jnp.float32)
    tokens = jax.random.randint(ks[1], (B, T), 0, q_vocab)

    @jax.jit
    def run(fv, tok):
        return abstract_noatt_forward(fv, tok, params)

    out = jax.block_until_ready(run(feat_v, tokens))
    assert out.shape == (B, ans_vocab) and bool(jnp.all(jnp.isfinite(out)))
    print("KERNEL_OK")
</pallas_src>

<mosaic_0001>
module attributes {stable_mosaic.version = 11 : i64} {
  func.func @abstract_noatt_kernel(%arg0: memref<8x1024xf32, #tpu.memory_space<vmem>>, %arg1: memref<64x128xf32, #tpu.memory_space<vmem>>, %arg2: memref<1024x128xbf16, #tpu.memory_space<vmem>>, %arg3: memref<1x128xf32, #tpu.memory_space<vmem>>, %arg4: memref<128x384xbf16, #tpu.memory_space<vmem>>, %arg5: memref<128x384xbf16, #tpu.memory_space<vmem>>, %arg6: memref<1x384xf32, #tpu.memory_space<vmem>>, %arg7: memref<1x384xf32, #tpu.memory_space<vmem>>, %arg8: memref<128x128xbf16, #tpu.memory_space<vmem>>, %arg9: memref<1x128xf32, #tpu.memory_space<vmem>>, %arg10: memref<128x128xbf16, #tpu.memory_space<vmem>>, %arg11: memref<1x128xf32, #tpu.memory_space<vmem>>, %arg12: memref<128x128xbf16, #tpu.memory_space<vmem>>, %arg13: memref<1x128xf32, #tpu.memory_space<vmem>>, %arg14: memref<128x128xbf16, #tpu.memory_space<vmem>>, %arg15: memref<1x128xf32, #tpu.memory_space<vmem>>, %arg16: memref<8x128xf32, #tpu.memory_space<vmem>>, %arg17: memref<64x384xf32, #tpu.memory_space<vmem>>) attributes {dimension_semantics = [], scalar_prefetch = 0 : i64, scratch_operands = 1 : i64, tpu.core_type = #tpu.core_type<tc>} {
    %c0 = arith.constant 0 : index
    %c0_0 = arith.constant 0 : index
    %0 = vector.load %arg0[%c0, %c0_0] : memref<8x1024xf32, #tpu.memory_space<vmem>>, vector<8x1024xf32>
    %1 = arith.truncf %0 : vector<8x1024xf32> to vector<8x1024xbf16>
    %c0_1 = arith.constant 0 : index
    %c0_2 = arith.constant 0 : index
    %2 = vector.load %arg2[%c0_1, %c0_2] : memref<1024x128xbf16, #tpu.memory_space<vmem>>, vector<1024x128xbf16>
    %cst = arith.constant dense<0.000000e+00> : vector<8x128xf32>
    %3 = tpu.matmul %1, %2, %cst {dimension_numbers = #tpu.dot_dimension_numbers<[1], [0], [0], [1], [0, 0, 1, 1], [], []>} : vector<8x1024xbf16>, vector<1024x128xbf16>, vector<8x128xf32> -> vector<8x128xf32>
    %c0_3 = arith.constant 0 : index
    %c0_4 = arith.constant 0 : index
    %4 = vector.load %arg3[%c0_3, %c0_4] : memref<1x128xf32, #tpu.memory_space<vmem>>, vector<1x128xf32>
    %5 = vector.broadcast %4 : vector<1x128xf32> to vector<8x128xf32>
    %6 = arith.addf %3, %5 : vector<8x128xf32>
    %7 = math.tanh %6 : vector<8x128xf32>
    %c0_5 = arith.constant 0 : index
    %c0_6 = arith.constant 0 : index
    %8 = vector.load %arg1[%c0_5, %c0_6] : memref<64x128xf32, #tpu.memory_space<vmem>>, vector<64x128xf32>
    %9 = arith.truncf %8 : vector<64x128xf32> to vector<64x128xbf16>
    %c0_7 = arith.constant 0 : index
    %c0_8 = arith.constant 0 : index
    %10 = vector.load %arg4[%c0_7, %c0_8] : memref<128x384xbf16, #tpu.memory_space<vmem>>, vector<128x384xbf16>
    %cst_9 = arith.constant dense<0.000000e+00> : vector<64x384xf32>
    %11 = tpu.matmul %9, %10, %cst_9 {dimension_numbers = #tpu.dot_dimension_numbers<[1], [0], [0], [1], [0, 0, 1, 1], [], []>} : vector<64x128xbf16>, vector<128x384xbf16>, vector<64x384xf32> -> vector<64x384xf32>
    %c0_10 = arith.constant 0 : index
    %c0_11 = arith.constant 0 : index
    %12 = vector.load %arg6[%c0_10, %c0_11] : memref<1x384xf32, #tpu.memory_space<vmem>>, vector<1x384xf32>
    %13 = vector.broadcast %12 : vector<1x384xf32> to vector<64x384xf32>
    %14 = arith.addf %11, %13 : vector<64x384xf32>
    %c0_12 = arith.constant 0 : index
    %c0_13 = arith.constant 0 : index
    %15 = vector.load %arg17[%c0_12, %c0_13] : memref<64x384xf32, #tpu.memory_space<vmem>>, vector<64x384xf32>
    tpu.vector_store %arg17[%c0_12, %c0_13], %14 {strides = array<i32>} : memref<64x384xf32, #tpu.memory_space<vmem>>, vector<64x384xf32>,
    %c0_14 = arith.constant 0 : index
    %c0_15 = arith.constant 0 : index
    %16 = vector.load %arg5[%c0_14, %c0_15] : memref<128x384xbf16, #tpu.memory_space<vmem>>, vector<128x384xbf16>
    %c0_16 = arith.constant 0 : index
    %c0_17 = arith.constant 0 : index
    %17 = vector.load %arg7[%c0_16, %c0_17] : memref<1x384xf32, #tpu.memory_space<vmem>>, vector<1x384xf32>
    %cst_18 = arith.constant 0.000000e+00 : f32
    %18 = vector.broadcast %cst_18 : f32 to vector<8x128xf32>
    %c0_i32 = arith.constant 0 : i32
    %c8_i32 = arith.constant 8 : i32
    %19 = arith.muli %c0_i32, %c8_i32 : i32
    %20 = tpu.assume_multiple %19, 8 : i32
    %21 = arith.index_cast %20 : i32 to index
    %c0_19 = arith.constant 0 : index
    %22 = vector.load %arg17[%21, %c0_19] : memref<64x384xf32, #tpu.memory_space<vmem>>, vector<8x384xf32>
    %23 = arith.truncf %18 : vector<8x128xf32> to vector<8x128xbf16>
    %cst_20 = arith.constant dense<0.000000e+00> : vector<8x384xf32>
    %24 = tpu.matmul %23, %16, %cst_20 {dimension_numbers = #tpu.dot_dimension_numbers<[1], [0], [0], [1], [0, 0, 1, 1], [], []>} : vector<8x128xbf16>, vector<128x384xbf16>, vector<8x384xf32> -> vector<8x384xf32>
    %25 = vector.broadcast %17 : vector<1x384xf32> to vector<8x384xf32>
    %26 = arith.addf %24, %25 : vector<8x384xf32>
    %27 = vector.extract_strided_slice %22 {offsets = [0, 0], sizes = [8, 128], strides = [1, 1]} : vector<8x384xf32> to vector<8x128xf32>
    %28 = vector.extract_strided_slice %22 {offsets = [0, 128], sizes = [8, 128], strides = [1, 1]} : vector<8x384xf32> to vector<8x128xf32>
    %29 = vector.extract_strided_slice %22 {offsets = [0, 256], sizes = [8, 128], strides = [1, 1]} : vector<8x384xf32> to vector<8x128xf32>
    %30 = vector.extract_strided_slice %26 {offsets = [0, 0], sizes = [8, 128], strides = [1, 1]} : vector<8x384xf32> to vector<8x128xf32>
    %31 = vector.extract_strided_slice %26 {offsets = [0, 128], sizes = [8, 128], strides = [1, 1]} : vector<8x384xf32> to vector<8x128xf32>
    %32 = vector.extract_strided_slice %26 {offsets = [0, 256], sizes = [8, 128], strides = [1, 1]} : vector<8x384xf32> to vector<8x128xf32>
    %33 = arith.addf %27, %30 : vector<8x128xf32>
    %34 = arith.negf %33 : vector<8x128xf32>
    %35 = math.exp %34 : vector<8x128xf32>
    %cst_21 = arith.constant 1.000000e+00 : f32
    %36 = vector.broadcast %cst_21 : f32 to vector<8x128xf32>
    %37 = arith.addf %36, %35 : vector<8x128xf32>
    %38 = arith.divf %36, %37 : vector<8x128xf32>
    %39 = arith.addf %28, %31 : vector<8x128xf32>
    %40 = arith.negf %39 : vector<8x128xf32>
    %41 = math.exp %40 : vector<8x128xf32>
    %cst_22 = arith.constant 1.000000e+00 : f32
    %42 = vector.broadcast %cst_22 : f32 to vector<8x128xf32>
    %43 = arith.addf %42, %41 : vector<8x128xf32>
    %44 = arith.divf %42, %43 : vector<8x128xf32>
    %45 = arith.mulf %38, %32 : vector<8x128xf32>
    %46 = arith.addf %29, %45 : vector<8x128xf32>
    %47 = math.tanh %46 : vector<8x128xf32>
    %cst_23 = arith.constant 1.000000e+00 : f32
    %48 = vector.broadcast %cst_23 : f32 to vector<8x128xf32>
    %49 = arith.subf %48, %44 : vector<8x128xf32>
    %50 = arith.mulf %49, %47 : vector<8x128xf32>
    %51 = arith.mulf %44, %18 : vector<8x128xf32>
    %52 = arith.addf %50, %51 : vector<8x128xf32>
    %c1_i32 = arith.constant 1 : i32
    %c8_i32_24 = arith.constant 8 : i32
    %53 = arith.muli %c1_i32, %c8_i32_24 : i32
    %54 = tpu.assume_multiple %53, 8 : i32
    %55 = arith.index_cast %54 : i32 to index
    %c0_25 = arith.constant 0 : index
    %56 = vector.load %arg17[%55, %c0_25] : memref<64x384xf32, #tpu.memory_space<vmem>>, vector<8x384xf32>
    %57 = arith.truncf %52 : vector<8x128xf32> to vector<8x128xbf16>
    %cst_26 = arith.constant dense<0.000000e+00> : vector<8x384xf32>
    %58 = tpu.matmul %57, %16, %cst_26 {dimension_numbers = #tpu.dot_dimension_numbers<[1], [0], [0], [1], [0, 0, 1, 1], [], []>} : vector<8x128xbf16>, vector<128x384xbf16>, vector<8x384xf32> -> vector<8x384xf32>
    %59 = vector.broadcast %17 : vector<1x384xf32> to vector<8x384xf32>
    %60 = arith.addf %58, %59 : vector<8x384xf32>
    %61 = vector.extract_strided_slice %56 {offsets = [0, 0], sizes = [8, 128], strides = [1, 1]} : vector<8x384xf32> to vector<8x128xf32>
    %62 = vector.extract_strided_slice %56 {offsets = [0, 128], sizes = [8, 128], strides = [1, 1]} : vector<8x384xf32> to vector<8x128xf32>
    %63 = vector.extract_strided_slice %56 {offsets = [0, 256], sizes = [8, 128], strides = [1, 1]} : vector<8x384xf32> to vector<8x128xf32>
    %64 = vector.extract_strided_slice %60 {offsets = [0, 0], sizes = [8, 128], strides = [1, 1]} : vector<8x384xf32> to vector<8x128xf32>
    %65 = vector.extract_strided_slice %60 {offsets = [0, 128], sizes = [8, 128], strides = [1, 1]} : vector<8x384xf32> to vector<8x128xf32>
    %66 = vector.extract_strided_slice %60 {offsets = [0, 256], sizes = [8, 128], strides = [1, 1]} : vector<8x384xf32> to vector<8x128xf32>
    %67 = arith.addf %61, %64 : vector<8x128xf32>
    %68 = arith.negf %67 : vector<8x128xf32>
    %69 = math.exp %68 : vector<8x128xf32>
    %cst_27 = arith.constant 1.000000e+00 : f32
    %70 = vector.broadcast %cst_27 : f32 to vector<8x128xf32>
    %71 = arith.addf %70, %69 : vector<8x128xf32>
    %72 = arith.divf %70, %71 : vector<8x128xf32>
    %73 = arith.addf %62, %65 : vector<8x128xf32>
    %74 = arith.negf %73 : vector<8x128xf32>
    %75 = math.exp %74 : vector<8x128xf32>
    %cst_28 = arith.constant 1.000000e+00 : f32
    %76 = vector.broadcast %cst_28 : f32 to vector<8x128xf32>
    %77 = arith.addf %76, %75 : vector<8x128xf32>
    %78 = arith.divf %76, %77 : vector<8x128xf32>
    %79 = arith.mulf %72, %66 : vector<8x128xf32>
    %80 = arith.addf %63, %79 : vector<8x128xf32>
    %81 = math.tanh %80 : vector<8x128xf32>
    %cst_29 = arith.constant 1.000000e+00 : f32
    %82 = vector.broadcast %cst_29 : f32 to vector<8x128xf32>
    %83 = arith.subf %82, %78 : vector<8x128xf32>
    %84 = arith.mulf %83, %81 : vector<8x128xf32>
    %85 = arith.mulf %78, %52 : vector<8x128xf32>
    %86 = arith.addf %84, %85 : vector<8x128xf32>
    %c2_i32 = arith.constant 2 : i32
    %c8_i32_30 = arith.constant 8 : i32
    %87 = arith.muli %c2_i32, %c8_i32_30 : i32
    %88 = tpu.assume_multiple %87, 8 : i32
    %89 = arith.index_cast %88 : i32 to index
    %c0_31 = arith.constant 0 : index
    %90 = vector.load %arg17[%89, %c0_31] : memref<64x384xf32, #tpu.memory_space<vmem>>, vector<8x384xf32>
    %91 = arith.truncf %86 : vector<8x128xf32> to vector<8x128xbf16>
    %cst_32 = arith.constant dense<0.000000e+00> : vector<8x384xf32>
    %92 = tpu.matmul %91, %16, %cst_32 {dimension_numbers = #tpu.dot_dimension_numbers<[1], [0], [0], [1], [0, 0, 1, 1], [], []>} : vector<8x128xbf16>, vector<128x384xbf16>, vector<8x384xf32> -> vector<8x384xf32>
    %93 = vector.broadcast %17 : vector<1x384xf32> to vector<8x384xf32>
    %94 = arith.addf %92, %93 : vector<8x384xf32>
    %95 = vector.extract_strided_slice %90 {offsets = [0, 0], sizes = [8, 128], strides = [1, 1]} : vector<8x384xf32> to vector<8x128xf32>
    %96 = vector.extract_strided_slice %90 {offsets = [0, 128], sizes = [8, 128], strides = [1, 1]} : vector<8x384xf32> to vector<8x128xf32>
    %97 = vector.extract_strided_slice %90 {offsets = [0, 256], sizes = [8, 128], strides = [1, 1]} : vector<8x384xf32> to vector<8x128xf32>
    %98 = vector.extract_strided_slice %94 {offsets = [0, 0], sizes = [8, 128], strides = [1, 1]} : vector<8x384xf32> to vector<8x128xf32>
    %99 = vector.extract_strided_slice %94 {offsets = [0, 128], sizes = [8, 128], strides = [1, 1]} : vector<8x384xf32> to vector<8x128xf32>
    %100 = vector.extract_strided_slice %94 {offsets = [0, 256], sizes = [8, 128], strides = [1, 1]} : vector<8x384xf32> to vector<8x128xf32>
    %101 = arith.addf %95, %98 : vector<8x128xf32>
    %102 = arith.negf %101 : vector<8x128xf32>
    %103 = math.exp %102 : vector<8x128xf32>
    %cst_33 = arith.constant 1.000000e+00 : f32
    %104 = vector.broadcast %cst_33 : f32 to vector<8x128xf32>
    %105 = arith.addf %104, %103 : vector<8x128xf32>
    %106 = arith.divf %104, %105 : vector<8x128xf32>
    %107 = arith.addf %96, %99 : vector<8x128xf32>
    %108 = arith.negf %107 : vector<8x128xf32>
    %109 = math.exp %108 : vector<8x128xf32>
    %cst_34 = arith.constant 1.000000e+00 : f32
    %110 = vector.broadcast %cst_34 : f32 to vector<8x128xf32>
    %111 = arith.addf %110, %109 : vector<8x128xf32>
    %112 = arith.divf %110, %111 : vector<8x128xf32>
    %113 = arith.mulf %106, %100 : vector<8x128xf32>
    %114 = arith.addf %97, %113 : vector<8x128xf32>
    %115 = math.tanh %114 : vector<8x128xf32>
    %cst_35 = arith.constant 1.000000e+00 : f32
    %116 = vector.broadcast %cst_35 : f32 to vector<8x128xf32>
    %117 = arith.subf %116, %112 : vector<8x128xf32>
    %118 = arith.mulf %117, %115 : vector<8x128xf32>
    %119 = arith.mulf %112, %86 : vector<8x128xf32>
    %120 = arith.addf %118, %119 : vector<8x128xf32>
    %c3_i32 = arith.constant 3 : i32
    %c8_i32_36 = arith.constant 8 : i32
    %121 = arith.muli %c3_i32, %c8_i32_36 : i32
    %122 = tpu.assume_multiple %121, 8 : i32
    %123 = arith.index_cast %122 : i32 to index
    %c0_37 = arith.constant 0 : index
    %124 = vector.load %arg17[%123, %c0_37] : memref<64x384xf32, #tpu.memory_space<vmem>>, vector<8x384xf32>
    %125 = arith.truncf %120 : vector<8x128xf32> to vector<8x128xbf16>
    %cst_38 = arith.constant dense<0.000000e+00> : vector<8x384xf32>
    %126 = tpu.matmul %125, %16, %cst_38 {dimension_numbers = #tpu.dot_dimension_numbers<[1], [0], [0], [1], [0, 0, 1, 1], [], []>} : vector<8x128xbf16>, vector<128x384xbf16>, vector<8x384xf32> -> vector<8x384xf32>
    %127 = vector.broadcast %17 : vector<1x384xf32> to vector<8x384xf32>
    %128 = arith.addf %126, %127 : vector<8x384xf32>
    %129 = vector.extract_strided_slice %124 {offsets = [0, 0], sizes = [8, 128], strides = [1, 1]} : vector<8x384xf32> to vector<8x128xf32>
    %130 = vector.extract_strided_slice %124 {offsets = [0, 128], sizes = [8, 128], strides = [1, 1]} : vector<8x384xf32> to vector<8x128xf32>
    %131 = vector.extract_strided_slice %124 {offsets = [0, 256], sizes = [8, 128], strides = [1, 1]} : vector<8x384xf32> to vector<8x128xf32>
    %132 = vector.extract_strided_slice %128 {offsets = [0, 0], sizes = [8, 128], strides = [1, 1]} : vector<8x384xf32> to vector<8x128xf32>
    %133 = vector.extract_strided_slice %128 {offsets = [0, 128], sizes = [8, 128], strides = [1, 1]} : vector<8x384xf32> to vector<8x128xf32>
    %134 = vector.extract_strided_slice %128 {offsets = [0, 256], sizes = [8, 128], strides = [1, 1]} : vector<8x384xf32> to vector<8x128xf32>
    %135 = arith.addf %129, %132 : vector<8x128xf32>
    %136 = arith.negf %135 : vector<8x128xf32>
    %137 = math.exp %136 : vector<8x128xf32>
    %cst_39 = arith.constant 1.000000e+00 : f32
    %138 = vector.broadcast %cst_39 : f32 to vector<8x128xf32>
    %139 = arith.addf %138, %137 : vector<8x128xf32>
    %140 = arith.divf %138, %139 : vector<8x128xf32>
    %141 = arith.addf %130, %133 : vector<8x128xf32>
    %142 = arith.negf %141 : vector<8x128xf32>
    %143 = math.exp %142 : vector<8x128xf32>
    %cst_40 = arith.constant 1.000000e+00 : f32
    %144 = vector.broadcast %cst_40 : f32 to vector<8x128xf32>
    %145 = arith.addf %144, %143 : vector<8x128xf32>
    %146 = arith.divf %144, %145 : vector<8x128xf32>
    %147 = arith.mulf %140, %134 : vector<8x128xf32>
    %148 = arith.addf %131, %147 : vector<8x128xf32>
    %149 = math.tanh %148 : vector<8x128xf32>
    %cst_41 = arith.constant 1.000000e+00 : f32
    %150 = vector.broadcast %cst_41 : f32 to vector<8x128xf32>
    %151 = arith.subf %150, %146 : vector<8x128xf32>
    %152 = arith.mulf %151, %149 : vector<8x128xf32>
    %153 = arith.mulf %146, %120 : vector<8x128xf32>
    %154 = arith.addf %152, %153 : vector<8x128xf32>
    %c4_i32 = arith.constant 4 : i32
    %c8_i32_42 = arith.constant 8 : i32
    %155 = arith.muli %c4_i32, %c8_i32_42 : i32
    %156 = tpu.assume_multiple %155, 8 : i32
    %157 = arith.index_cast %156 : i32 to index
    %c0_43 = arith.constant 0 : index
    %158 = vector.load %arg17[%157, %c0_43] : memref<64x384xf32, #tpu.memory_space<vmem>>, vector<8x384xf32>
    %159 = arith.truncf %154 : vector<8x128xf32> to vector<8x128xbf16>
    %cst_44 = arith.constant dense<0.000000e+00> : vector<8x384xf32>
    %160 = tpu.matmul %159, %16, %cst_44 {dimension_numbers = #tpu.dot_dimension_numbers<[1], [0], [0], [1], [0, 0, 1, 1], [], []>} : vector<8x128xbf16>, vector<128x384xbf16>, vector<8x384xf32> -> vector<8x384xf32>
    %161 = vector.broadcast %17 : vector<1x384xf32> to vector<8x384xf32>
    %162 = arith.addf %160, %161 : vector<8x384xf32>
    %163 = vector.extract_strided_slice %158 {offsets = [0, 0], sizes = [8, 128], strides = [1, 1]} : vector<8x384xf32> to vector<8x128xf32>
    %164 = vector.extract_strided_slice %158 {offsets = [0, 128], sizes = [8, 128], strides = [1, 1]} : vector<8x384xf32> to vector<8x128xf32>
    %165 = vector.extract_strided_slice %158 {offsets = [0, 256], sizes = [8, 128], strides = [1, 1]} : vector<8x384xf32> to vector<8x128xf32>
    %166 = vector.extract_strided_slice %162 {offsets = [0, 0], sizes = [8, 128], strides = [1, 1]} : vector<8x384xf32> to vector<8x128xf32>
    %167 = vector.extract_strided_slice %162 {offsets = [0, 128], sizes = [8, 128], strides = [1, 1]} : vector<8x384xf32> to vector<8x128xf32>
    %168 = vector.extract_strided_slice %162 {offsets = [0, 256], sizes = [8, 128], strides = [1, 1]} : vector<8x384xf32> to vector<8x128xf32>
    %169 = arith.addf %163, %166 : vector<8x128xf32>
    %170 = arith.negf %169 : vector<8x128xf32>
    %171 = math.exp %170 : vector<8x128xf32>
    %cst_45 = arith.constant 1.000000e+00 : f32
    %172 = vector.broadcast %cst_45 : f32 to vector<8x128xf32>
    %173 = arith.addf %172, %171 : vector<8x128xf32>
    %174 = arith.divf %172, %173 : vector<8x128xf32>
    %175 = arith.addf %164, %167 : vector<8x128xf32>
    %176 = arith.negf %175 : vector<8x128xf32>
    %177 = math.exp %176 : vector<8x128xf32>
    %cst_46 = arith.constant 1.000000e+00 : f32
    %178 = vector.broadcast %cst_46 : f32 to vector<8x128xf32>
    %179 = arith.addf %178, %177 : vector<8x128xf32>
    %180 = arith.divf %178, %179 : vector<8x128xf32>
    %181 = arith.mulf %174, %168 : vector<8x128xf32>
    %182 = arith.addf %165, %181 : vector<8x128xf32>
    %183 = math.tanh %182 : vector<8x128xf32>
    %cst_47 = arith.constant 1.000000e+00 : f32
    %184 = vector.broadcast %cst_47 : f32 to vector<8x128xf32>
    %185 = arith.subf %184, %180 : vector<8x128xf32>
    %186 = arith.mulf %185, %183 : vector<8x128xf32>
    %187 = arith.mulf %180, %154 : vector<8x128xf32>
    %188 = arith.addf %186, %187 : vector<8x128xf32>
    %c5_i32 = arith.constant 5 : i32
    %c8_i32_48 = arith.constant 8 : i32
    %189 = arith.muli %c5_i32, %c8_i32_48 : i32
    %190 = tpu.assume_multiple %189, 8 : i32
    %191 = arith.index_cast %190 : i32 to index
    %c0_49 = arith.constant 0 : index
    %192 = vector.load %arg17[%191, %c0_49] : memref<64x384xf32, #tpu.memory_space<vmem>>, vector<8x384xf32>
    %193 = arith.truncf %188 : vector<8x128xf32> to vector<8x128xbf16>
    %cst_50 = arith.constant dense<0.000000e+00> : vector<8x384xf32>
    %194 = tpu.matmul %193, %16, %cst_50 {dimension_numbers = #tpu.dot_dimension_numbers<[1], [0], [0], [1], [0, 0, 1, 1], [], []>} : vector<8x128xbf16>, vector<128x384xbf16>, vector<8x384xf32> -> vector<8x384xf32>
    %195 = vector.broadcast %17 : vector<1x384xf32> to vector<8x384xf32>
    %196 = arith.addf %194, %195 : vector<8x384xf32>
    %197 = vector.extract_strided_slice %192 {offsets = [0, 0], sizes = [8, 128], strides = [1, 1]} : vector<8x384xf32> to vector<8x128xf32>
    %198 = vector.extract_strided_slice %192 {offsets = [0, 128], sizes = [8, 128], strides = [1, 1]} : vector<8x384xf32> to vector<8x128xf32>
    %199 = vector.extract_strided_slice %192 {offsets = [0, 256], sizes = [8, 128], strides = [1, 1]} : vector<8x384xf32> to vector<8x128xf32>
    %200 = vector.extract_strided_slice %196 {offsets = [0, 0], sizes = [8, 128], strides = [1, 1]} : vector<8x384xf32> to vector<8x128xf32>
    %201 = vector.extract_strided_slice %196 {offsets = [0, 128], sizes = [8, 128], strides = [1, 1]} : vector<8x384xf32> to vector<8x128xf32>
    %202 = vector.extract_strided_slice %196 {offsets = [0, 256], sizes = [8, 128], strides = [1, 1]} : vector<8x384xf32> to vector<8x128xf32>
    %203 = arith.addf %197, %200 : vector<8x128xf32>
    %204 = arith.negf %203 : vector<8x128xf32>
    %205 = math.exp %204 : vector<8x128xf32>
    %cst_51 = arith.constant 1.000000e+00 : f32
    %206 = vector.broadcast %cst_51 : f32 to vector<8x128xf32>
    %207 = arith.addf %206, %205 : vector<8x128xf32>
    %208 = arith.divf %206, %207 : vector<8x128xf32>
    %209 = arith.addf %198, %201 : vector<8x128xf32>
    %210 = arith.negf %209 : vector<8x128xf32>
    %211 = math.exp %210 : vector<8x128xf32>
    %cst_52 = arith.constant 1.000000e+00 : f32
    %212 = vector.broadcast %cst_52 : f32 to vector<8x128xf32>
    %213 = arith.addf %212, %211 : vector<8x128xf32>
    %214 = arith.divf %212, %213 : vector<8x128xf32>
    %215 = arith.mulf %208, %202 : vector<8x128xf32>
    %216 = arith.addf %199, %215 : vector<8x128xf32>
    %217 = math.tanh %216 : vector<8x128xf32>
    %cst_53 = arith.constant 1.000000e+00 : f32
    %218 = vector.broadcast %cst_53 : f32 to vector<8x128xf32>
    %219 = arith.subf %218, %214 : vector<8x128xf32>
    %220 = arith.mulf %219, %217 : vector<8x128xf32>
    %221 = arith.mulf %214, %188 : vector<8x128xf32>
    %222 = arith.addf %220, %221 : vector<8x128xf32>
    %c6_i32 = arith.constant 6 : i32
    %c8_i32_54 = arith.constant 8 : i32
    %223 = arith.muli %c6_i32, %c8_i32_54 : i32
    %224 = tpu.assume_multiple %223, 8 : i32
    %225 = arith.index_cast %224 : i32 to index
    %c0_55 = arith.constant 0 : index
    %226 = vector.load %arg17[%225, %c0_55] : memref<64x384xf32, #tpu.memory_space<vmem>>, vector<8x384xf32>
    %227 = arith.truncf %222 : vector<8x128xf32> to vector<8x128xbf16>
    %cst_56 = arith.constant dense<0.000000e+00> : vector<8x384xf32>
    %228 = tpu.matmul %227, %16, %cst_56 {dimension_numbers = #tpu.dot_dimension_numbers<[1], [0], [0], [1], [0, 0, 1, 1], [], []>} : vector<8x128xbf16>, vector<128x384xbf16>, vector<8x384xf32> -> vector<8x384xf32>
    %229 = vector.broadcast %17 : vector<1x384xf32> to vector<8x384xf32>
    %230 = arith.addf %228, %229 : vector<8x384xf32>
    %231 = vector.extract_strided_slice %226 {offsets = [0, 0], sizes = [8, 128], strides = [1, 1]} : vector<8x384xf32> to vector<8x128xf32>
    %232 = vector.extract_strided_slice %226 {offsets = [0, 128], sizes = [8, 128], strides = [1, 1]} : vector<8x384xf32> to vector<8x128xf32>
    %233 = vector.extract_strided_slice %226 {offsets = [0, 256], sizes = [8, 128], strides = [1, 1]} : vector<8x384xf32> to vector<8x128xf32>
    %234 = vector.extract_strided_slice %230 {offsets = [0, 0], sizes = [8, 128], strides = [1, 1]} : vector<8x384xf32> to vector<8x128xf32>
    %235 = vector.extract_strided_slice %230 {offsets = [0, 128], sizes = [8, 128], strides = [1, 1]} : vector<8x384xf32> to vector<8x128xf32>
    %236 = vector.extract_strided_slice %230 {offsets = [0, 256], sizes = [8, 128], strides = [1, 1]} : vector<8x384xf32> to vector<8x128xf32>
    %237 = arith.addf %231, %234 : vector<8x128xf32>
    %238 = arith.negf %237 : vector<8x128xf32>
    %239 = math.exp %238 : vector<8x128xf32>
    %cst_57 = arith.constant 1.000000e+00 : f32
    %240 = vector.broadcast %cst_57 : f32 to vector<8x128xf32>
    %241 = arith.addf %240, %239 : vector<8x128xf32>
    %242 = arith.divf %240, %241 : vector<8x128xf32>
    %243 = arith.addf %232, %235 : vector<8x128xf32>
    %244 = arith.negf %243 : vector<8x128xf32>
    %245 = math.exp %244 : vector<8x128xf32>
    %cst_58 = arith.constant 1.000000e+00 : f32
    %246 = vector.broadcast %cst_58 : f32 to vector<8x128xf32>
    %247 = arith.addf %246, %245 : vector<8x128xf32>
    %248 = arith.divf %246, %247 : vector<8x128xf32>
    %249 = arith.mulf %242, %236 : vector<8x128xf32>
    %250 = arith.addf %233, %249 : vector<8x128xf32>
    %251 = math.tanh %250 : vector<8x128xf32>
    %cst_59 = arith.constant 1.000000e+00 : f32
    %252 = vector.broadcast %cst_59 : f32 to vector<8x128xf32>
    %253 = arith.subf %252, %248 : vector<8x128xf32>
    %254 = arith.mulf %253, %251 : vector<8x128xf32>
    %255 = arith.mulf %248, %222 : vector<8x128xf32>
    %256 = arith.addf %254, %255 : vector<8x128xf32>
    %c7_i32 = arith.constant 7 : i32
    %c8_i32_60 = arith.constant 8 : i32
    %257 = arith.muli %c7_i32, %c8_i32_60 : i32
    %258 = tpu.assume_multiple %257, 8 : i32
    %259 = arith.index_cast %258 : i32 to index
    %c0_61 = arith.constant 0 : index
    %260 = vector.load %arg17[%259, %c0_61] : memref<64x384xf32, #tpu.memory_space<vmem>>, vector<8x384xf32>
    %261 = arith.truncf %256 : vector<8x128xf32> to vector<8x128xbf16>
    %cst_62 = arith.constant dense<0.000000e+00> : vector<8x384xf32>
    %262 = tpu.matmul %261, %16, %cst_62 {dimension_numbers = #tpu.dot_dimension_numbers<[1], [0], [0], [1], [0, 0, 1, 1], [], []>} : vector<8x128xbf16>, vector<128x384xbf16>, vector<8x384xf32> -> vector<8x384xf32>
    %263 = vector.broadcast %17 : vector<1x384xf32> to vector<8x384xf32>
    %264 = arith.addf %262, %263 : vector<8x384xf32>
    %265 = vector.extract_strided_slice %260 {offsets = [0, 0], sizes = [8, 128], strides = [1, 1]} : vector<8x384xf32> to vector<8x128xf32>
    %266 = vector.extract_strided_slice %260 {offsets = [0, 128], sizes = [8, 128], strides = [1, 1]} : vector<8x384xf32> to vector<8x128xf32>
    %267 = vector.extract_strided_slice %260 {offsets = [0, 256], sizes = [8, 128], strides = [1, 1]} : vector<8x384xf32> to vector<8x128xf32>
    %268 = vector.extract_strided_slice %264 {offsets = [0, 0], sizes = [8, 128], strides = [1, 1]} : vector<8x384xf32> to vector<8x128xf32>
    %269 = vector.extract_strided_slice %264 {offsets = [0, 128], sizes = [8, 128], strides = [1, 1]} : vector<8x384xf32> to vector<8x128xf32>
    %270 = vector.extract_strided_slice %264 {offsets = [0, 256], sizes = [8, 128], strides = [1, 1]} : vector<8x384xf32> to vector<8x128xf32>
    %271 = arith.addf %265, %268 : vector<8x128xf32>
    %272 = arith.negf %271 : vector<8x128xf32>
    %273 = math.exp %272 : vector<8x128xf32>
    %cst_63 = arith.constant 1.000000e+00 : f32
    %274 = vector.broadcast %cst_63 : f32 to vector<8x128xf32>
    %275 = arith.addf %274, %273 : vector<8x128xf32>
    %276 = arith.divf %274, %275 : vector<8x128xf32>
    %277 = arith.addf %266, %269 : vector<8x128xf32>
    %278 = arith.negf %277 : vector<8x128xf32>
    %279 = math.exp %278 : vector<8x128xf32>
    %cst_64 = arith.constant 1.000000e+00 : f32
    %280 = vector.broadcast %cst_64 : f32 to vector<8x128xf32>
    %281 = arith.addf %280, %279 : vector<8x128xf32>
    %282 = arith.divf %280, %281 : vector<8x128xf32>
    %283 = arith.mulf %276, %270 : vector<8x128xf32>
    %284 = arith.addf %267, %283 : vector<8x128xf32>
    %285 = math.tanh %284 : vector<8x128xf32>
    %cst_65 = arith.constant 1.000000e+00 : f32
    %286 = vector.broadcast %cst_65 : f32 to vector<8x128xf32>
    %287 = arith.subf %286, %282 : vector<8x128xf32>
    %288 = arith.mulf %287, %285 : vector<8x128xf32>
    %289 = arith.mulf %282, %256 : vector<8x128xf32>
    %290 = arith.addf %288, %289 : vector<8x128xf32>
    %c8_i32_66 = arith.constant 8 : i32
    %291 = arith.truncf %290 : vector<8x128xf32> to vector<8x128xbf16>
    %c0_67 = arith.constant 0 : index
    %c0_68 = arith.constant 0 : index
    %292 = vector.load %arg8[%c0_67, %c0_68] : memref<128x128xbf16, #tpu.memory_space<vmem>>, vector<128x128xbf16>
    %cst_69 = arith.constant dense<0.000000e+00> : vector<8x128xf32>
    %293 = tpu.matmul %291, %292, %cst_69 {dimension_numbers = #tpu.dot_dimension_numbers<[1], [0], [0], [1], [0, 0, 1, 1], [], []>} : vector<8x128xbf16>, vector<128x128xbf16>, vector<8x128xf32> -> vector<8x128xf32>
    %c0_70 = arith.constant 0 : index
    %c0_71 = arith.constant 0 : index
    %294 = vector.load %arg9[%c0_70, %c0_71] : memref<1x128xf32, #tpu.memory_space<vmem>>, vector<1x128xf32>
    %295 = vector.broadcast %294 : vector<1x128xf32> to vector<8x128xf32>
    %296 = arith.addf %293, %295 : vector<8x128xf32>
    %297 = math.tanh %296 : vector<8x128xf32>
    %298 = arith.truncf %7 : vector<8x128xf32> to vector<8x128xbf16>
    %c0_72 = arith.constant 0 : index
    %c0_73 = arith.constant 0 : index
    %299 = vector.load %arg10[%c0_72, %c0_73] : memref<128x128xbf16, #tpu.memory_space<vmem>>, vector<128x128xbf16>
    %cst_74 = arith.constant dense<0.000000e+00> : vector<8x128xf32>
    %300 = tpu.matmul %298, %299, %cst_74 {dimension_numbers = #tpu.dot_dimension_numbers<[1], [0], [0], [1], [0, 0, 1, 1], [], []>} : vector<8x128xbf16>, vector<128x128xbf16>, vector<8x128xf32> -> vector<8x128xf32>
    %c0_75 = arith.constant 0 : index
    %c0_76 = arith.constant 0 : index
    %301 = vector.load %arg11[%c0_75, %c0_76] : memref<1x128xf32, #tpu.memory_space<vmem>>, vector<1x128xf32>
    %302 = vector.broadcast %301 : vector<1x128xf32> to vector<8x128xf32>
    %303 = arith.addf %300, %302 : vector<8x128xf32>
    %304 = math.tanh %303 : vector<8x128xf32>
    %305 = arith.truncf %297 : vector<8x128xf32> to vector<8x128xbf16>
    %c0_77 = arith.constant 0 : index
    %c0_78 = arith.constant 0 : index
    %306 = vector.load %arg12[%c0_77, %c0_78] : memref<128x128xbf16, #tpu.memory_space<vmem>>, vector<128x128xbf16>
    %cst_79 = arith.constant dense<0.000000e+00> : vector<8x128xf32>
    %307 = tpu.matmul %305, %306, %cst_79 {dimension_numbers = #tpu.dot_dimension_numbers<[1], [0], [0], [1], [0, 0, 1, 1], [], []>} : vector<8x128xbf16>, vector<128x128xbf16>, vector<8x128xf32> -> vector<8x128xf32>
    %c0_80 = arith.constant 0 : index
    %c0_81 = arith.constant 0 : index
    %308 = vector.load %arg13[%c0_80, %c0_81] : memref<1x128xf32, #tpu.memory_space<vmem>>, vector<1x128xf32>
    %309 = vector.broadcast %308 : vector<1x128xf32> to vector<8x128xf32>
    %310 = arith.addf %307, %309 : vector<8x128xf32>
    %311 = math.tanh %310 : vector<8x128xf32>
    %312 = arith.mulf %304, %311 : vector<8x128xf32>
    %313 = arith.truncf %312 : vector<8x128xf32> to vector<8x128xbf16>
    %c0_82 = arith.constant 0 : index
    %c0_83 = arith.constant 0 : index
    %314 = vector.load %arg14[%c0_82, %c0_83] : memref<128x128xbf16, #tpu.memory_space<vmem>>, vector<128x128xbf16>
    %cst_84 = arith.constant dense<0.000000e+00> : vector<8x128xf32>
    %315 = tpu.matmul %313, %314, %cst_84 {dimension_numbers = #tpu.dot_dimension_numbers<[1], [0], [0], [1], [0, 0, 1, 1], [], []>} : vector<8x128xbf16>, vector<128x128xbf16>, vector<8x128xf32> -> vector<8x128xf32>
    %c0_85 = arith.constant 0 : index
    %c0_86 = arith.constant 0 : index
    %316 = vector.load %arg15[%c0_85, %c0_86] : memref<1x128xf32, #tpu.memory_space<vmem>>, vector<1x128xf32>
    %317 = vector.broadcast %316 : vector<1x128xf32> to vector<8x128xf32>
    %318 = arith.addf %315, %317 : vector<8x128xf32>
    %c0_87 = arith.constant 0 : index
    %c0_88 = arith.constant 0 : index
    %319 = vector.load %arg16[%c0_87, %c0_88] : memref<8x128xf32, #tpu.memory_space<vmem>>, vector<8x128xf32>
    tpu.vector_store %arg16[%c0_87, %c0_88], %318 {strides = array<i32>} : memref<8x128xf32, #tpu.memory_space<vmem>>, vector<8x128xf32>,
    return
  }
}

</mosaic_0001>

<llo_original>
// kernel: run.1
$region0: #{run.1}
  #allocation0 [shape = 'u32[]', space=smem, size = 0x4, offset = 0x4, fixed_abs, tag = 'smem constant byte address 0x4 - core index']
  #allocation1 [shape = 'u32[144,128]{1,0:T(1,128)}', space=vmem, size = 0x12000, scoped, tag = 'internal scratch']
  #allocation2 [shape = 'f32[64,384]{1,0:T(8,128)}', space=vmem, size = 0x18000, scoped, tag = 'scratch operand']
  %s0 = inlined_call_operand.vmem [shape: f32[8,1024], index: 0, kind: input, shape index: {}]
  %s1 = inlined_call_operand.vmem [shape: f32[64,128], index: 1, kind: input, shape index: {}]
  %s2 = inlined_call_operand.vmem [shape: bf16[1024,128], index: 2, kind: input, shape index: {}]
  %s3 = inlined_call_operand.vmem [shape: f32[1,128], index: 3, kind: input, shape index: {}]
  %s4 = inlined_call_operand.vmem [shape: bf16[128,384], index: 4, kind: input, shape index: {}]
  %s5 = inlined_call_operand.vmem [shape: bf16[128,384], index: 5, kind: input, shape index: {}]
  %s6 = inlined_call_operand.vmem [shape: f32[1,384], index: 6, kind: input, shape index: {}]
  %s7 = inlined_call_operand.vmem [shape: f32[1,384], index: 7, kind: input, shape index: {}]
  %s8 = inlined_call_operand.vmem [shape: bf16[128,128], index: 8, kind: input, shape index: {}]
  %s9 = inlined_call_operand.vmem [shape: f32[1,128], index: 9, kind: input, shape index: {}]
  %s10 = inlined_call_operand.vmem [shape: bf16[128,128], index: 10, kind: input, shape index: {}]
  %s11 = inlined_call_operand.vmem [shape: f32[1,128], index: 11, kind: input, shape index: {}]
  %s12 = inlined_call_operand.vmem [shape: bf16[128,128], index: 12, kind: input, shape index: {}]
  %s13 = inlined_call_operand.vmem [shape: f32[1,128], index: 13, kind: input, shape index: {}]
  %s14 = inlined_call_operand.vmem [shape: bf16[128,128], index: 14, kind: input, shape index: {}]
  %s15 = inlined_call_operand.vmem [shape: f32[1,128], index: 15, kind: input, shape index: {}]
  %s16 = inlined_call_operand.vmem [shape: f32[8,128], index: 16, kind: output, shape index: {}]
  %s17 = sld [smem:[#allocation0]]
  $region74: #{run.1} parent=0
    _
  %s19 = ssub.s32 1, %s17
  %s20 = scalar_select 0, %s19, %s17
  // Predicated region
  $region2: #{run.1} parent=0 // pred_check
    _
  $region3: #{run.1} parent=0 // pred_check_branch
    %22 = sbr.rel (0) target = $region5
  $region4: #{run.1} parent=0 // pred_region
    _
  $region5: #{run.1} parent=0 // pred_fallthru
    _
  // Predicated region
  $region6: #{run.1} parent=0 // pred_check
    _
  $region7: #{run.1} parent=0 // pred_check_branch
    %24 = sbr.rel (0) target = $region9
  $region8: #{run.1} parent=0 // pred_region
    _
  $region9: #{run.1} parent=0 // pred_fallthru
    _
  // Predicated region
  $region10: #{run.1} parent=0 // pred_check
    _
  $region11: #{run.1} parent=0 // pred_check_branch
    %26 = sbr.rel (0) target = $region13
  $region12: #{run.1} parent=0 // pred_region
    _
  $region13: #{run.1} parent=0 // pred_fallthru
    _
  // Predicated region
  $region14: #{run.1} parent=0 // pred_check
    _
  $region15: #{run.1} parent=0 // pred_check_branch
    %28 = sbr.rel (0) target = $region17
  $region16: #{run.1} parent=0 // pred_region
    _
  $region17: #{run.1} parent=0 // pred_fallthru
    _
  // Predicated region
  $region18: #{run.1} parent=0 // pred_check
    _
  $region19: #{run.1} parent=0 // pred_check_branch
    %30 = sbr.rel (0) target = $region21
  $region20: #{run.1} parent=0 // pred_region
    _
  $region21: #{run.1} parent=0 // pred_fallthru
    _
  // Predicated region
  $region22: #{run.1} parent=0 // pred_check
    _
  $region23: #{run.1} parent=0 // pred_check_branch
    %32 = sbr.rel (0) target = $region25
  $region24: #{run.1} parent=0 // pred_region
    _
  $region25: #{run.1} parent=0 // pred_fallthru
    _
  // Predicated region
  $region26: #{run.1} parent=0 // pred_check
    _
  $region27: #{run.1} parent=0 // pred_check_branch
    %34 = sbr.rel (0) target = $region29
  $region28: #{run.1} parent=0 // pred_region
    _
  $region29: #{run.1} parent=0 // pred_fallthru
    _
  // Predicated region
  $region30: #{run.1} parent=0 // pred_check
    _
  $region31: #{run.1} parent=0 // pred_check_branch
    %36 = sbr.rel (0) target = $region33
  $region32: #{run.1} parent=0 // pred_region
    _
  $region33: #{run.1} parent=0 // pred_fallthru
    _
  // Predicated region
  $region34: #{run.1} parent=0 // pred_check
    _
  $region35: #{run.1} parent=0 // pred_check_branch
    %38 = sbr.rel (0) target = $region37
  $region36: #{run.1} parent=0 // pred_region
    _
  $region37: #{run.1} parent=0 // pred_fallthru
    _
  // Predicated region
  $region38: #{run.1} parent=0 // pred_check
    _
  $region39: #{run.1} parent=0 // pred_check_branch
    %40 = sbr.rel (0) target = $region41
  $region40: #{run.1} parent=0 // pred_region
    _
  $region41: #{run.1} parent=0 // pred_fallthru
    _
  // Predicated region
  $region42: #{run.1} parent=0 // pred_check
    _
  $region43: #{run.1} parent=0 // pred_check_branch
    %42 = sbr.rel (0) target = $region45
  $region44: #{run.1} parent=0 // pred_region
    _
  $region45: #{run.1} parent=0 // pred_fallthru
    _
  // Predicated region
  $region46: #{run.1} parent=0 // pred_check
    _
  $region47: #{run.1} parent=0 // pred_check_branch
    %44 = sbr.rel (0) target = $region49
  $region48: #{run.1} parent=0 // pred_region
    _
  $region49: #{run.1} parent=0 // pred_fallthru
    _
  // Predicated region
  $region50: #{run.1} parent=0 // pred_check
    _
  $region51: #{run.1} parent=0 // pred_check_branch
    %46 = sbr.rel (0) target = $region53
  $region52: #{run.1} parent=0 // pred_region
    _
  $region53: #{run.1} parent=0 // pred_fallthru
    _
  // Predicated region
  $region54: #{run.1} parent=0 // pred_check
    _
  $region55: #{run.1} parent=0 // pred_check_branch
    %48 = sbr.rel (0) target = $region57
  $region56: #{run.1} parent=0 // pred_region
    _
  $region57: #{run.1} parent=0 // pred_fallthru
    _
  // Predicated region
  $region58: #{run.1} parent=0 // pred_check
    _
  $region59: #{run.1} parent=0 // pred_check_branch
    %50 = sbr.rel (0) target = $region61
  $region60: #{run.1} parent=0 // pred_region
    _
  $region61: #{run.1} parent=0 // pred_fallthru
    _
  // Predicated region
  $region62: #{run.1} parent=0 // pred_check
    _
  $region63: #{run.1} parent=0 // pred_check_branch
    %52 = sbr.rel (0) target = $region65
  $region64: #{run.1} parent=0 // pred_region
    _
  $region65: #{run.1} parent=0 // pred_fallthru
    _
  %v54 = vld [vmem:[%s0] sm:$0xff]
  %v55 = vld [vmem:[%s0 + $0x8] sm:$0xff]
  %v56 = vld [vmem:[%s0 + $0x10] sm:$0xff]
  %v57 = vld [vmem:[%s0 + $0x18] sm:$0xff]
  %v58 = vld [vmem:[%s0 + $0x20] sm:$0xff]
  %v59 = vld [vmem:[%s0 + $0x28] sm:$0xff]
  %v60 = vld [vmem:[%s0 + $0x30] sm:$0xff]
  %v61 = vld [vmem:[%s0 + $0x38] sm:$0xff]
  %v62 = vpack.c.bf16 %v54, %v54
  %v63 = vpack.c.bf16 %v55, %v55
  %v64 = vpack.c.bf16 %v56, %v56
  %v65 = vpack.c.bf16 %v57, %v57
  %v66 = vpack.c.bf16 %v58, %v58
  %v67 = vpack.c.bf16 %v59, %v59
  %v68 = vpack.c.bf16 %v60, %v60
  %v69 = vpack.c.bf16 %v61, %v61
  %v70 = vld [vmem:[%s2] sm:$0xf]
  %v71 = vld [vmem:[%s2 + $0x4] sm:$0xf]
  %v72 = vld [vmem:[%s2 + $0x8] sm:$0xf]
  %v73 = vld [vmem:[%s2 + $0xc] sm:$0xf]
  %v74 = vld [vmem:[%s2 + $0x10] sm:$0xf]
  %v75 = vld [vmem:[%s2 + $0x14] sm:$0xf]
  %v76 = vld [vmem:[%s2 + $0x18] sm:$0xf]
  %v77 = vld [vmem:[%s2 + $0x1c] sm:$0xf]
  %v78 = vld [vmem:[%s2 + $0x20] sm:$0xf]
  %v79 = vld [vmem:[%s2 + $0x24] sm:$0xf]
  %v80 = vld [vmem:[%s2 + $0x28] sm:$0xf]
  %v81 = vld [vmem:[%s2 + $0x2c] sm:$0xf]
  %v82 = vld [vmem:[%s2 + $0x30] sm:$0xf]
  %v83 = vld [vmem:[%s2 + $0x34] sm:$0xf]
  %v84 = vld [vmem:[%s2 + $0x38] sm:$0xf]
  %v85 = vld [vmem:[%s2 + $0x3c] sm:$0xf]
  %v86 = vld [vmem:[%s2 + $0x40] sm:$0xf]
  %v87 = vld [vmem:[%s2 + $0x44] sm:$0xf]
  %v88 = vld [vmem:[%s2 + $0x48] sm:$0xf]
  %v89 = vld [vmem:[%s2 + $0x4c] sm:$0xf]
  %v90 = vld [vmem:[%s2 + $0x50] sm:$0xf]
  %v91 = vld [vmem:[%s2 + $0x54] sm:$0xf]
  %v92 = vld [vmem:[%s2 + $0x58] sm:$0xf]
  %v93 = vld [vmem:[%s2 + $0x5c] sm:$0xf]
  %v94 = vld [vmem:[%s2 + $0x60] sm:$0xf]
  %v95 = vld [vmem:[%s2 + $0x64] sm:$0xf]
  %v96 = vld [vmem:[%s2 + $0x68] sm:$0xf]
  %v97 = vld [vmem:[%s2 + $0x6c] sm:$0xf]
  %v98 = vld [vmem:[%s2 + $0x70] sm:$0xf]
  %v99 = vld [vmem:[%s2 + $0x74] sm:$0xf]
  %v100 = vld [vmem:[%s2 + $0x78] sm:$0xf]
  %v101 = vld [vmem:[%s2 + $0x7c] sm:$0xf]
  %v102 = vld [vmem:[%s2 + $0x80] sm:$0xf]
  %v103 = vld [vmem:[%s2 + $0x84] sm:$0xf]
  %v104 = vld [vmem:[%s2 + $0x88] sm:$0xf]
  %v105 = vld [vmem:[%s2 + $0x8c] sm:$0xf]
  %v106 = vld [vmem:[%s2 + $0x90] sm:$0xf]
  %v107 = vld [vmem:[%s2 + $0x94] sm:$0xf]
  %v108 = vld [vmem:[%s2 + $0x98] sm:$0xf]
  %v109 = vld [vmem:[%s2 + $0x9c] sm:$0xf]
  %v110 = vld [vmem:[%s2 + $0xa0] sm:$0xf]
  %v111 = vld [vmem:[%s2 + $0xa4] sm:$0xf]
  %v112 = vld [vmem:[%s2 + $0xa8] sm:$0xf]
  %v113 = vld [vmem:[%s2 + $0xac] sm:$0xf]
  %v114 = vld [vmem:[%s2 + $0xb0] sm:$0xf]
  %v115 = vld [vmem:[%s2 + $0xb4] sm:$0xf]
  %v116 = vld [vmem:[%s2 + $0xb8] sm:$0xf]
  %v117 = vld [vmem:[%s2 + $0xbc] sm:$0xf]
  %v118 = vld [vmem:[%s2 + $0xc0] sm:$0xf]
  %v119 = vld [vmem:[%s2 + $0xc4] sm:$0xf]
  %v120 = vld [vmem:[%s2 + $0xc8] sm:$0xf]
  %v121 = vld [vmem:[%s2 + $0xcc] sm:$0xf]
  %v122 = vld [vmem:[%s2 + $0xd0] sm:$0xf]
  %v123 = vld [vmem:[%s2 + $0xd4] sm:$0xf]
  %v124 = vld [vmem:[%s2 + $0xd8] sm:$0xf]
  %v125 = vld [vmem:[%s2 + $0xdc] sm:$0xf]
  %v126 = vld [vmem:[%s2 + $0xe0] sm:$0xf]
  %v127 = vld [vmem:[%s2 + $0xe4] sm:$0xf]
  %v128 = vld [vmem:[%s2 + $0xe8] sm:$0xf]
  %v129 = vld [vmem:[%s2 + $0xec] sm:$0xf]
  %v130 = vld [vmem:[%s2 + $0xf0] sm:$0xf]
  %v131 = vld [vmem:[%s2 + $0xf4] sm:$0xf]
  %v132 = vld [vmem:[%s2 + $0xf8] sm:$0xf]
  %v133 = vld [vmem:[%s2 + $0xfc] sm:$0xf]
  %v134 = vld [vmem:[%s2 + $0x100] sm:$0xf]
  %v135 = vld [vmem:[%s2 + $0x104] sm:$0xf]
  %v136 = vld [vmem:[%s2 + $0x108] sm:$0xf]
  %v137 = vld [vmem:[%s2 + $0x10c] sm:$0xf]
  %v138 = vld [vmem:[%s2 + $0x110] sm:$0xf]
  %v139 = vld [vmem:[%s2 + $0x114] sm:$0xf]
  %v140 = vld [vmem:[%s2 + $0x118] sm:$0xf]
  %v141 = vld [vmem:[%s2 + $0x11c] sm:$0xf]
  %v142 = vld [vmem:[%s2 + $0x120] sm:$0xf]
  %v143 = vld [vmem:[%s2 + $0x124] sm:$0xf]
  %v144 = vld [vmem:[%s2 + $0x128] sm:$0xf]
  %v145 = vld [vmem:[%s2 + $0x12c] sm:$0xf]
  %v146 = vld [vmem:[%s2 + $0x130] sm:$0xf]
  %v147 = vld [vmem:[%s2 + $0x134] sm:$0xf]
  %v148 = vld [vmem:[%s2 + $0x138] sm:$0xf]
  %v149 = vld [vmem:[%s2 + $0x13c] sm:$0xf]
  %v150 = vld [vmem:[%s2 + $0x140] sm:$0xf]
  %v151 = vld [vmem:[%s2 + $0x144] sm:$0xf]
  %v152 = vld [vmem:[%s2 + $0x148] sm:$0xf]
  %v153 = vld [vmem:[%s2 + $0x14c] sm:$0xf]
  %v154 = vld [vmem:[%s2 + $0x150] sm:$0xf]
  %v155 = vld [vmem:[%s2 + $0x154] sm:$0xf]
  %v156 = vld [vmem:[%s2 + $0x158] sm:$0xf]
  %v157 = vld [vmem:[%s2 + $0x15c] sm:$0xf]
  %v158 = vld [vmem:[%s2 + $0x160] sm:$0xf]
  %v159 = vld [vmem:[%s2 + $0x164] sm:$0xf]
  %v160 = vld [vmem:[%s2 + $0x168] sm:$0xf]
  %v161 = vld [vmem:[%s2 + $0x16c] sm:$0xf]
  %v162 = vld [vmem:[%s2 + $0x170] sm:$0xf]
  %v163 = vld [vmem:[%s2 + $0x174] sm:$0xf]
  %v164 = vld [vmem:[%s2 + $0x178] sm:$0xf]
  %v165 = vld [vmem:[%s2 + $0x17c] sm:$0xf]
  %v166 = vld [vmem:[%s2 + $0x180] sm:$0xf]
  %v167 = vld [vmem:[%s2 + $0x184] sm:$0xf]
  %v168 = vld [vmem:[%s2 + $0x188] sm:$0xf]
  %v169 = vld [vmem:[%s2 + $0x18c] sm:$0xf]
  %v170 = vld [vmem:[%s2 + $0x190] sm:$0xf]
  %v171 = vld [vmem:[%s2 + $0x194] sm:$0xf]
  %v172 = vld [vmem:[%s2 + $0x198] sm:$0xf]
  %v173 = vld [vmem:[%s2 + $0x19c] sm:$0xf]
  %v174 = vld [vmem:[%s2 + $0x1a0] sm:$0xf]
  %v175 = vld [vmem:[%s2 + $0x1a4] sm:$0xf]
  %v176 = vld [vmem:[%s2 + $0x1a8] sm:$0xf]
  %v177 = vld [vmem:[%s2 + $0x1ac] sm:$0xf]
  %v178 = vld [vmem:[%s2 + $0x1b0] sm:$0xf]
  %v179 = vld [vmem:[%s2 + $0x1b4] sm:$0xf]
  %v180 = vld [vmem:[%s2 + $0x1b8] sm:$0xf]
  %v181 = vld [vmem:[%s2 + $0x1bc] sm:$0xf]
  %v182 = vld [vmem:[%s2 + $0x1c0] sm:$0xf]
  %v183 = vld [vmem:[%s2 + $0x1c4] sm:$0xf]
  %v184 = vld [vmem:[%s2 + $0x1c8] sm:$0xf]
  %v185 = vld [vmem:[%s2 + $0x1cc] sm:$0xf]
  %v186 = vld [vmem:[%s2 + $0x1d0] sm:$0xf]
  %v187 = vld [vmem:[%s2 + $0x1d4] sm:$0xf]
  %v188 = vld [vmem:[%s2 + $0x1d8] sm:$0xf]
  %v189 = vld [vmem:[%s2 + $0x1dc] sm:$0xf]
  %v190 = vld [vmem:[%s2 + $0x1e0] sm:$0xf]
  %v191 = vld [vmem:[%s2 + $0x1e4] sm:$0xf]
  %v192 = vld [vmem:[%s2 + $0x1e8] sm:$0xf]
  %v193 = vld [vmem:[%s2 + $0x1ec] sm:$0xf]
  %v194 = vld [vmem:[%s2 + $0x1f0] sm:$0xf]
  %v195 = vld [vmem:[%s2 + $0x1f4] sm:$0xf]
  %v196 = vld [vmem:[%s2 + $0x1f8] sm:$0xf]
  %v197 = vld [vmem:[%s2 + $0x1fc] sm:$0xf]
  %v198 = vld [vmem:[%s3] sm:$0x1]
  %v200 = vlaneseq
  %v201 = vshrl.u32 %v200, 7
  %v202 = vsub.s32 0, %v201
  %v203 = vrot.slane %v198, %v202
  %v333 = vunpack.c.l.b16 %v70
  %v334 = vunpack.c.l.b16 %v71
  %v335 = vunpack.c.l.b16 %v72
  %v336 = vunpack.c.l.b16 %v73
  %v337 = vunpack.c.l.b16 %v74
  %v338 = vunpack.c.l.b16 %v75
  %v339 = vunpack.c.l.b16 %v76
  %v340 = vunpack.c.l.b16 %v77
  %v341 = vunpack.c.l.b16 %v78
  %v342 = vunpack.c.l.b16 %v79
  %v343 = vunpack.c.l.b16 %v80
  %v344 = vunpack.c.l.b16 %v81
  %v345 = vunpack.c.l.b16 %v82
  %v346 = vunpack.c.l.b16 %v83
  %v347 = vunpack.c.l.b16 %v84
  %v348 = vunpack.c.l.b16 %v85
  %v349 = vunpack.c.l.b16 %v86
  %v350 = vunpack.c.l.b16 %v87
  %v351 = vunpack.c.l.b16 %v88
  %v352 = vunpack.c.l.b16 %v89
  %v353 = vunpack.c.l.b16 %v90
  %v354 = vunpack.c.l.b16 %v91
  %v355 = vunpack.c.l.b16 %v92
  %v356 = vunpack.c.l.b16 %v93
  %v357 = vunpack.c.l.b16 %v94
  %v358 = vunpack.c.l.b16 %v95
  %v359 = vunpack.c.l.b16 %v96
  %v360 = vunpack.c.l.b16 %v97
  %v361 = vunpack.c.l.b16 %v98
  %v362 = vunpack.c.l.b16 %v99
  %v363 = vunpack.c.l.b16 %v100
  %v364 = vunpack.c.l.b16 %v101
  %v365 = vunpack.c.l.b16 %v102
  %v366 = vunpack.c.l.b16 %v103
  %v367 = vunpack.c.l.b16 %v104
  %v368 = vunpack.c.l.b16 %v105
  %v369 = vunpack.c.l.b16 %v106
  %v370 = vunpack.c.l.b16 %v107
  %v371 = vunpack.c.l.b16 %v108
  %v372 = vunpack.c.l.b16 %v109
  %v373 = vunpack.c.l.b16 %v110
  %v374 = vunpack.c.l.b16 %v111
  %v375 = vunpack.c.l.b16 %v112
  %v376 = vunpack.c.l.b16 %v113
  %v377 = vunpack.c.l.b16 %v114
  %v378 = vunpack.c.l.b16 %v115
  %v379 = vunpack.c.l.b16 %v116
  %v380 = vunpack.c.l.b16 %v117
  %v381 = vunpack.c.l.b16 %v118
  %v382 = vunpack.c.l.b16 %v119
  %v383 = vunpack.c.l.b16 %v120
  %v384 = vunpack.c.l.b16 %v121
  %v385 = vunpack.c.l.b16 %v122
  %v386 = vunpack.c.l.b16 %v123
  %v387 = vunpack.c.l.b16 %v124
  %v388 = vunpack.c.l.b16 %v125
  %v389 = vunpack.c.l.b16 %v126
  %v390 = vunpack.c.l.b16 %v127
  %v391 = vunpack.c.l.b16 %v128
  %v392 = vunpack.c.l.b16 %v129
  %v393 = vunpack.c.l.b16 %v130
  %v394 = vunpack.c.l.b16 %v131
  %v395 = vunpack.c.l.b16 %v132
  %v396 = vunpack.c.l.b16 %v133
  %v397 = vunpack.c.l.b16 %v134
  %v398 = vunpack.c.l.b16 %v135
  %v399 = vunpack.c.l.b16 %v136
  %v400 = vunpack.c.l.b16 %v137
  %v401 = vunpack.c.l.b16 %v138
  %v402 = vunpack.c.l.b16 %v139
  %v403 = vunpack.c.l.b16 %v140
  %v404 = vunpack.c.l.b16 %v141
  %v405 = vunpack.c.l.b16 %v142
  %v406 = vunpack.c.l.b16 %v143
  %v407 = vunpack.c.l.b16 %v144
  %v408 = vunpack.c.l.b16 %v145
  %v409 = vunpack.c.l.b16 %v146
  %v410 = vunpack.c.l.b16 %v147
  %v411 = vunpack.c.l.b16 %v148
  %v412 = vunpack.c.l.b16 %v149
  %v413 = vunpack.c.l.b16 %v150
  %v414 = vunpack.c.l.b16 %v151
  %v415 = vunpack.c.l.b16 %v152
  %v416 = vunpack.c.l.b16 %v153
  %v417 = vunpack.c.l.b16 %v154
  %v418 = vunpack.c.l.b16 %v155
  %v419 = vunpack.c.l.b16 %v156
  %v420 = vunpack.c.l.b16 %v157
  %v421 = vunpack.c.l.b16 %v158
  %v422 = vunpack.c.l.b16 %v159
  %v423 = vunpack.c.l.b16 %v160
  %v424 = vunpack.c.l.b16 %v161
  %v425 = vunpack.c.l.b16 %v162
  %v426 = vunpack.c.l.b16 %v163
  %v427 = vunpack.c.l.b16 %v164
  %v428 = vunpack.c.l.b16 %v165
  %v429 = vunpack.c.l.b16 %v166
  %v430 = vunpack.c.l.b16 %v167
  %v431 = vunpack.c.l.b16 %v168
  %v432 = vunpack.c.l.b16 %v169
  %v433 = vunpack.c.l.b16 %v170
  %v434 = vunpack.c.l.b16 %v171
  %v435 = vunpack.c.l.b16 %v172
  %v436 = vunpack.c.l.b16 %v173
  %v437 = vunpack.c.l.b16 %v174
  %v438 = vunpack.c.l.b16 %v175
  %v439 = vunpack.c.l.b16 %v176
  %v440 = vunpack.c.l.b16 %v177
  %v441 = vunpack.c.l.b16 %v178
  %v442 = vunpack.c.l.b16 %v179
  %v443 = vunpack.c.l.b16 %v180
  %v444 = vunpack.c.l.b16 %v181
  %v445 = vunpack.c.l.b16 %v182
  %v446 = vunpack.c.l.b16 %v183
  %v447 = vunpack.c.l.b16 %v184
  %v448 = vunpack.c.l.b16 %v185
  %v449 = vunpack.c.l.b16 %v186
  %v450 = vunpack.c.l.b16 %v187
  %v451 = vunpack.c.l.b16 %v188
  %v452 = vunpack.c.l.b16 %v189
  %v453 = vunpack.c.l.b16 %v190
  %v454 = vunpack.c.l.b16 %v191
  %v455 = vunpack.c.l.b16 %v192
  %v456 = vunpack.c.l.b16 %v193
  %v457 = vunpack.c.l.b16 %v194
  %v458 = vunpack.c.l.b16 %v195
  %v459 = vunpack.c.l.b16 %v196
  %v460 = vunpack.c.l.b16 %v197
  %v461 = vpack.c.b16 %v334, %v333
  %v462 = vpack.c.b16 %v336, %v335
  %v463 = vpack.c.b16 %v338, %v337
  %v464 = vpack.c.b16 %v340, %v339
  %v465 = vpack.c.b16 %v342, %v341
  %v466 = vpack.c.b16 %v344, %v343
  %v467 = vpack.c.b16 %v346, %v345
  %v468 = vpack.c.b16 %v348, %v347
  %v469 = vpack.c.b16 %v350, %v349
  %v470 = vpack.c.b16 %v352, %v351
  %v471 = vpack.c.b16 %v354, %v353
  %v472 = vpack.c.b16 %v356, %v355
  %v473 = vpack.c.b16 %v358, %v357
  %v474 = vpack.c.b16 %v360, %v359
  %v475 = vpack.c.b16 %v362, %v361
  %v476 = vpack.c.b16 %v364, %v363
  %v477 = vpack.c.b16 %v366, %v365
  %v478 = vpack.c.b16 %v368, %v367
  %v479 = vpack.c.b16 %v370, %v369
  %v480 = vpack.c.b16 %v372, %v371
  %v481 = vpack.c.b16 %v374, %v373
  %v482 = vpack.c.b16 %v376, %v375
  %v483 = vpack.c.b16 %v378, %v377
  %v484 = vpack.c.b16 %v380, %v379
  %v485 = vpack.c.b16 %v382, %v381
  %v486 = vpack.c.b16 %v384, %v383
  %v487 = vpack.c.b16 %v386, %v385
  %v488 = vpack.c.b16 %v388, %v387
  %v489 = vpack.c.b16 %v390, %v389
  %v490 = vpack.c.b16 %v392, %v391
  %v491 = vpack.c.b16 %v394, %v393
  %v492 = vpack.c.b16 %v396, %v395
  %v493 = vpack.c.b16 %v398, %v397
  %v494 = vpack.c.b16 %v400, %v399
  %v495 = vpack.c.b16 %v402, %v401
  %v496 = vpack.c.b16 %v404, %v403
  %v497 = vpack.c.b16 %v406, %v405
  %v498 = vpack.c.b16 %v408, %v407
  %v499 = vpack.c.b16 %v410, %v409
  %v500 = vpack.c.b16 %v412, %v411
  %v501 = vpack.c.b16 %v414, %v413
  %v502 = vpack.c.b16 %v416, %v415
  %v503 = vpack.c.b16 %v418, %v417
  %v504 = vpack.c.b16 %v420, %v419
  %v505 = vpack.c.b16 %v422, %v421
  %v506 = vpack.c.b16 %v424, %v423
  %v507 = vpack.c.b16 %v426, %v425
  %v508 = vpack.c.b16 %v428, %v427
  %v509 = vpack.c.b16 %v430, %v429
  %v510 = vpack.c.b16 %v432, %v431
  %v511 = vpack.c.b16 %v434, %v433
  %v512 = vpack.c.b16 %v436, %v435
  %v513 = vpack.c.b16 %v438, %v437
  %v514 = vpack.c.b16 %v440, %v439
  %v515 = vpack.c.b16 %v442, %v441
  %v516 = vpack.c.b16 %v444, %v443
  %v517 = vpack.c.b16 %v446, %v445
  %v518 = vpack.c.b16 %v448, %v447
  %v519 = vpack.c.b16 %v450, %v449
  %v520 = vpack.c.b16 %v452, %v451
  %v521 = vpack.c.b16 %v454, %v453
  %v522 = vpack.c.b16 %v456, %v455
  %v523 = vpack.c.b16 %v458, %v457
  %v524 = vpack.c.b16 %v460, %v459
  %589 = vmatprep.subr.bf16.mxu0 0
  %590 = vmatpush1.bf16.msra.mxu0 %v461
  %591 = vmatprep.subr.bf16.mxu0 0
  %592 = vmatpush1.bf16.msra.mxu0 %v462
  %593 = vmatprep.subr.bf16.mxu0 0
  %594 = vmatpush1.bf16.msra.mxu0 %v463
  %595 = vmatprep.subr.bf16.mxu0 0
  %596 = vmatpush1.bf16.msra.mxu0 %v464
  %597 = vmatprep.subr.bf16.mxu0 0
  %598 = vmatpush1.bf16.msra.mxu0 %v465
  %599 = vmatprep.subr.bf16.mxu0 0
  %600 = vmatpush1.bf16.msra.mxu0 %v466
  %601 = vmatprep.subr.bf16.mxu0 0
  %602 = vmatpush1.bf16.msra.mxu0 %v467
  %603 = vmatprep.subr.bf16.mxu0 0
  %604 = vmatpush1.bf16.msra.mxu0 %v468
  %605 = vmatprep.subr.bf16.mxu0 0
  %606 = vmatpush1.bf16.msra.mxu0 %v469
  %607 = vmatprep.subr.bf16.mxu0 0
  %608 = vmatpush1.bf16.msra.mxu0 %v470
  %609 = vmatprep.subr.bf16.mxu0 0
  %610 = vmatpush1.bf16.msra.mxu0 %v471
  %611 = vmatprep.subr.bf16.mxu0 0
  %612 = vmatpush1.bf16.msra.mxu0 %v472
  %613 = vmatprep.subr.bf16.mxu0 0
  %614 = vmatpush1.bf16.msra.mxu0 %v473
  %615 = vmatprep.subr.bf16.mxu0 0
  %616 = vmatpush1.bf16.msra.mxu0 %v474
  %617 = vmatprep.subr.bf16.mxu0 0
  %618 = vmatpush1.bf16.msra.mxu0 %v475
  %619 = vmatprep.subr.bf16.mxu0 0
  %620 = vmatpush1.bf16.msra.mxu0 %v476
  %621 = vmatprep.mubr.bf16.mxu0 %v63
  %622 = vmatmul.mubr.bf16.gmra.mrb[0].mxu0 %v62
  %v623 = vpop.f32.mrb[0].mxu0
  %v624 = vadd.f32 %v203, %v623
  %v625 = vpop.f32.mrb[0].mxu0
  %v626 = vpop.f32.mrb[0].mxu0
  %v627 = vpop.f32.mrb[0].mxu0
  %628 = vdwg.mxu0
  %629 = vmatprep.subr.bf16.mxu0 0
  %630 = vmatpush1.bf16.msra.mxu0 %v477
  %631 = vmatprep.subr.bf16.mxu0 0
  %632 = vmatpush1.bf16.msra.mxu0 %v478
  %633 = vmatprep.subr.bf16.mxu0 0
  %634 = vmatpush1.bf16.msra.mxu0 %v479
  %635 = vmatprep.subr.bf16.mxu0 0
  %636 = vmatpush1.bf16.msra.mxu0 %v480
  %637 = vmatprep.subr.bf16.mxu0 0
  %638 = vmatpush1.bf16.msra.mxu0 %v481
  %639 = vmatprep.subr.bf16.mxu0 0
  %640 = vmatpush1.bf16.msra.mxu0 %v482
  %641 = vmatprep.subr.bf16.mxu0 0
  %642 = vmatpush1.bf16.msra.mxu0 %v483
  %643 = vmatprep.subr.bf16.mxu0 0
  %644 = vmatpush1.bf16.msra.mxu0 %v484
  %645 = vmatprep.subr.bf16.mxu0 0
  %646 = vmatpush1.bf16.msra.mxu0 %v485
  %647 = vmatprep.subr.bf16.mxu0 0
  %648 = vmatpush1.bf16.msra.mxu0 %v486
  %649 = vmatprep.subr.bf16.mxu0 0
  %650 = vmatpush1.bf16.msra.mxu0 %v487
  %651 = vmatprep.subr.bf16.mxu0 0
  %652 = vmatpush1.bf16.msra.mxu0 %v488
  %653 = vmatprep.subr.bf16.mxu0 0
  %654 = vmatpush1.bf16.msra.mxu0 %v489
  %655 = vmatprep.subr.bf16.mxu0 0
  %656 = vmatpush1.bf16.msra.mxu0 %v490
  %657 = vmatprep.subr.bf16.mxu0 0
  %658 = vmatpush1.bf16.msra.mxu0 %v491
  %659 = vmatprep.subr.bf16.mxu0 0
  %660 = vmatpush1.bf16.msra.mxu0 %v492
  %661 = vmatprep.mubr.bf16.mxu0 %v65
  %662 = vmatmul.mubr.bf16.gmra.mrb[0].mxu0 %v64
  %v663 = vpop.f32.mrb[0].mxu0
  %v664 = vadd.f32 %v624, %v663
  %v665 = vpop.f32.mrb[0].mxu0
  %v666 = vpop.f32.mrb[0].mxu0
  %v667 = vpop.f32.mrb[0].mxu0
  %668 = vdwg.mxu0
  %669 = vmatprep.subr.bf16.mxu0 0
  %670 = vmatpush1.bf16.msra.mxu0 %v493
  %671 = vmatprep.subr.bf16.mxu0 0
  %672 = vmatpush1.bf16.msra.mxu0 %v494
  %673 = vmatprep.subr.bf16.mxu0 0
  %674 = vmatpush1.bf16.msra.mxu0 %v495
  %675 = vmatprep.subr.bf16.mxu0 0
  %676 = vmatpush1.bf16.msra.mxu0 %v496
  %677 = vmatprep.subr.bf16.mxu0 0
  %678 = vmatpush1.bf16.msra.mxu0 %v497
  %679 = vmatprep.subr.bf16.mxu0 0
  %680 = vmatpush1.bf16.msra.mxu0 %v498
  %681 = vmatprep.subr.bf16.mxu0 0
  %682 = vmatpush1.bf16.msra.mxu0 %v499
  %683 = vmatprep.subr.bf16.mxu0 0
  %684 = vmatpush1.bf16.msra.mxu0 %v500
  %685 = vmatprep.subr.bf16.mxu0 0
  %686 = vmatpush1.bf16.msra.mxu0 %v501
  %687 = vmatprep.subr.bf16.mxu0 0
  %688 = vmatpush1.bf16.msra.mxu0 %v502
  %689 = vmatprep.subr.bf16.mxu0 0
  %690 = vmatpush1.bf16.msra.mxu0 %v503
  %691 = vmatprep.subr.bf16.mxu0 0
  %692 = vmatpush1.bf16.msra.mxu0 %v504
  %693 = vmatprep.subr.bf16.mxu0 0
  %694 = vmatpush1.bf16.msra.mxu0 %v505
  %695 = vmatprep.subr.bf16.mxu0 0
  %696 = vmatpush1.bf16.msra.mxu0 %v506
  %697 = vmatprep.subr.bf16.mxu0 0
  %698 = vmatpush1.bf16.msra.mxu0 %v507
  %699 = vmatprep.subr.bf16.mxu0 0
  %700 = vmatpush1.bf16.msra.mxu0 %v508
  %701 = vmatprep.mubr.bf16.mxu0 %v67
  %702 = vmatmul.mubr.bf16.gmra.mrb[0].mxu0 %v66
  %v703 = vpop.f32.mrb[0].mxu0
  %v704 = vadd.f32 %v664, %v703
  %v705 = vpop.f32.mrb[0].mxu0
  %v706 = vpop.f32.mrb[0].mxu0
  %v707 = vpop.f32.mrb[0].mxu0
  %708 = vdwg.mxu0
  %709 = vmatprep.subr.bf16.mxu0 0
  %710 = vmatpush1.bf16.msra.mxu0 %v509
  %711 = vmatprep.subr.bf16.mxu0 0
  %712 = vmatpush1.bf16.msra.mxu0 %v510
  %713 = vmatprep.subr.bf16.mxu0 0
  %714 = vmatpush1.bf16.msra.mxu0 %v511
  %715 = vmatprep.subr.bf16.mxu0 0
  %716 = vmatpush1.bf16.msra.mxu0 %v512
  %717 = vmatprep.subr.bf16.mxu0 0
  %718 = vmatpush1.bf16.msra.mxu0 %v513
  %719 = vmatprep.subr.bf16.mxu0 0
  %720 = vmatpush1.bf16.msra.mxu0 %v514
  %721 = vmatprep.subr.bf16.mxu0 0
  %722 = vmatpush1.bf16.msra.mxu0 %v515
  %723 = vmatprep.subr.bf16.mxu0 0
  %724 = vmatpush1.bf16.msra.mxu0 %v516
  %725 = vmatprep.subr.bf16.mxu0 0
  %726 = vmatpush1.bf16.msra.mxu0 %v517
  %727 = vmatprep.subr.bf16.mxu0 0
  %728 = vmatpush1.bf16.msra.mxu0 %v518
  %729 = vmatprep.subr.bf16.mxu0 0
  %730 = vmatpush1.bf16.msra.mxu0 %v519
  %731 = vmatprep.subr.bf16.mxu0 0
  %732 = vmatpush1.bf16.msra.mxu0 %v520
  %733 = vmatprep.subr.bf16.mxu0 0
  %734 = vmatpush1.bf16.msra.mxu0 %v521
  %735 = vmatprep.subr.bf16.mxu0 0
  %736 = vmatpush1.bf16.msra.mxu0 %v522
  %737 = vmatprep.subr.bf16.mxu0 0
  %738 = vmatpush1.bf16.msra.mxu0 %v523
  %739 = vmatprep.subr.bf16.mxu0 0
  %740 = vmatpush1.bf16.msra.mxu0 %v524
  %741 = vmatprep.mubr.bf16.mxu0 %v69
  %742 = vmatmul.mubr.bf16.gmra.mrb[0].mxu0 %v68
  %v743 = vpop.f32.mrb[0].mxu0
  %v744 = vadd.f32 %v704, %v743
  %v745 = vpop.f32.mrb[0].mxu0
  %v746 = vpop.f32.mrb[0].mxu0
  %v747 = vpop.f32.mrb[0].mxu0
  %748 = vdwg.mxu0
  %v749 = vtanh.pop %v744
  %v750 = vld [vmem:[%s1] sm:$0xff]
  %v751 = vld [vmem:[%s1 + $0x8] sm:$0xff]
  %v752 = vld [vmem:[%s1 + $0x10] sm:$0xff]
  %v753 = vld [vmem:[%s1 + $0x18] sm:$0xff]
  %v754 = vld [vmem:[%s1 + $0x20] sm:$0xff]
  %v755 = vld [vmem:[%s1 + $0x28] sm:$0xff]
  %v756 = vld [vmem:[%s1 + $0x30] sm:$0xff]
  %v757 = vld [vmem:[%s1 + $0x38] sm:$0xff]
  %v758 = vpack.c.bf16 %v751, %v750
  %v759 = vpack.c.bf16 %v753, %v752
  %v760 = vpack.c.bf16 %v755, %v754
  %v761 = vpack.c.bf16 %v757, %v756
  %v762 = vld [vmem:[%s4] sm:$0xff]
  %v763 = vld [vmem:[%s4 + $0x8] sm:$0xf]
  %v764 = vld [vmem:[%s4 + $0xc] sm:$0xff]
  %v765 = vld [vmem:[%s4 + $0x14] sm:$0xf]
  %v766 = vld [vmem:[%s4 + $0x18] sm:$0xff]
  %v767 = vld [vmem:[%s4 + $0x20] sm:$0xf]
  %v768 = vld [vmem:[%s4 + $0x24] sm:$0xff]
  %v769 = vld [vmem:[%s4 + $0x2c] sm:$0xf]
  %v770 = vld [vmem:[%s4 + $0x30] sm:$0xff]
  %v771 = vld [vmem:[%s4 + $0x38] sm:$0xf]
  %v772 = vld [vmem:[%s4 + $0x3c] sm:$0xff]
  %v773 = vld [vmem:[%s4 + $0x44] sm:$0xf]
  %v774 = vld [vmem:[%s4 + $0x48] sm:$0xff]
  %v775 = vld [vmem:[%s4 + $0x50] sm:$0xf]
  %v776 = vld [vmem:[%s4 + $0x54] sm:$0xff]
  %v777 = vld [vmem:[%s4 + $0x5c] sm:$0xf]
  %v778 = vld [vmem:[%s4 + $0x60] sm:$0xff]
  %v779 = vld [vmem:[%s4 + $0x68] sm:$0xf]
  %v780 = vld [vmem:[%s4 + $0x6c] sm:$0xff]
  %v781 = vld [vmem:[%s4 + $0x74] sm:$0xf]
  %v782 = vld [vmem:[%s4 + $0x78] sm:$0xff]
  %v783 = vld [vmem:[%s4 + $0x80] sm:$0xf]
  %v784 = vld [vmem:[%s4 + $0x84] sm:$0xff]
  %v785 = vld [vmem:[%s4 + $0x8c] sm:$0xf]
  %v786 = vld [vmem:[%s4 + $0x90] sm:$0xff]
  %v787 = vld [vmem:[%s4 + $0x98] sm:$0xf]
  %v788 = vld [vmem:[%s4 + $0x9c] sm:$0xff]
  %v789 = vld [vmem:[%s4 + $0xa4] sm:$0xf]
  %v790 = vld [vmem:[%s4 + $0xa8] sm:$0xff]
  %v791 = vld [vmem:[%s4 + $0xb0] sm:$0xf]
  %v792 = vld [vmem:[%s4 + $0xb4] sm:$0xff]
  %v793 = vld [vmem:[%s4 + $0xbc] sm:$0xf]
  %v794 = vld [vmem:[%s6] sm:$0x7]
  %v796 = vlaneseq
  %v797 = vshrl.u32 %v796, 7
  %v798 = vsub.s32 0, %v797
  %v799 = vrot.slane %v794, %v798
  %v800 = vlaneseq
  %v801 = vshrl.u32 %v800, 7
  %v802 = vsub.s32 1, %v801
  %v803 = vrot.slane %v794, %v802
  %v804 = vlaneseq
  %v805 = vshrl.u32 %v804, 7
  %v806 = vsub.s32 2, %v805
  %v807 = vrot.slane %v794, %v806
  %v843 = vunpack.c.l.b16 %v762
  %v844 = vunpack.c.h.b16 %v762
  %v845 = vunpack.c.l.b16 %v763
  %v846 = vunpack.c.l.b16 %v764
  %v847 = vunpack.c.h.b16 %v764
  %v848 = vunpack.c.l.b16 %v765
  %v849 = vunpack.c.l.b16 %v766
  %v850 = vunpack.c.h.b16 %v766
  %v851 = vunpack.c.l.b16 %v767
  %v852 = vunpack.c.l.b16 %v768
  %v853 = vunpack.c.h.b16 %v768
  %v854 = vunpack.c.l.b16 %v769
  %v855 = vunpack.c.l.b16 %v770
  %v856 = vunpack.c.h.b16 %v770
  %v857 = vunpack.c.l.b16 %v771
  %v858 = vunpack.c.l.b16 %v772
  %v859 = vunpack.c.h.b16 %v772
  %v860 = vunpack.c.l.b16 %v773
  %v861 = vunpack.c.l.b16 %v774
  %v862 = vunpack.c.h.b16 %v774
  %v863 = vunpack.c.l.b16 %v775
  %v864 = vunpack.c.l.b16 %v776
  %v865 = vunpack.c.h.b16 %v776
  %v866 = vunpack.c.l.b16 %v777
  %v867 = vunpack.c.l.b16 %v778
  %v868 = vunpack.c.h.b16 %v778
  %v869 = vunpack.c.l.b16 %v779
  %v870 = vunpack.c.l.b16 %v780
  %v871 = vunpack.c.h.b16 %v780
  %v872 = vunpack.c.l.b16 %v781
  %v873 = vunpack.c.l.b16 %v782
  %v874 = vunpack.c.h.b16 %v782
  %v875 = vunpack.c.l.b16 %v783
  %v876 = vunpack.c.l.b16 %v784
  %v877 = vunpack.c.h.b16 %v784
  %v878 = vunpack.c.l.b16 %v785
  %v879 = vunpack.c.l.b16 %v786
  %v880 = vunpack.c.h.b16 %v786
  %v881 = vunpack.c.l.b16 %v787
  %v882 = vunpack.c.l.b16 %v788
  %v883 = vunpack.c.h.b16 %v788
  %v884 = vunpack.c.l.b16 %v789
  %v885 = vunpack.c.l.b16 %v790
  %v886 = vunpack.c.h.b16 %v790
  %v887 = vunpack.c.l.b16 %v791
  %v888 = vunpack.c.l.b16 %v792
  %v889 = vunpack.c.h.b16 %v792
  %v890 = vunpack.c.l.b16 %v793
  %v891 = vpack.c.b16 %v846, %v843
  %v892 = vpack.c.b16 %v847, %v844
  %v893 = vpack.c.b16 %v848, %v845
  %v894 = vpack.c.b16 %v852, %v849
  %v895 = vpack.c.b16 %v853, %v850
  %v896 = vpack.c.b16 %v854, %v851
  %v897 = vpack.c.b16 %v858, %v855
  %v898 = vpack.c.b16 %v859, %v856
  %v899 = vpack.c.b16 %v860, %v857
  %v900 = vpack.c.b16 %v864, %v861
  %v901 = vpack.c.b16 %v865, %v862
  %v902 = vpack.c.b16 %v866, %v863
  %v903 = vpack.c.b16 %v870, %v867
  %v904 = vpack.c.b16 %v871, %v868
  %v905 = vpack.c.b16 %v872, %v869
  %v906 = vpack.c.b16 %v876, %v873
  %v907 = vpack.c.b16 %v877, %v874
  %v908 = vpack.c.b16 %v878, %v875
  %v909 = vpack.c.b16 %v882, %v879
  %v910 = vpack.c.b16 %v883, %v880
  %v911 = vpack.c.b16 %v884, %v881
  %v912 = vpack.c.b16 %v888, %v885
  %v913 = vpack.c.b16 %v889, %v886
  %v914 = vpack.c.b16 %v890, %v887
  %939 = vmatprep.subr.bf16.mxu0 %v892
  %940 = vmatpush1.bf16.msra.mxu0 %v891
  %941 = vmatprep.subr.bf16.mxu0 %v895
  %942 = vmatpush1.bf16.msra.mxu0 %v894
  %943 = vmatprep.subr.bf16.mxu0 %v898
  %944 = vmatpush1.bf16.msra.mxu0 %v897
  %945 = vmatprep.subr.bf16.mxu0 %v901
  %946 = vmatpush1.bf16.msra.mxu0 %v900
  %947 = vmatprep.subr.bf16.mxu0 %v904
  %948 = vmatpush1.bf16.msra.mxu0 %v903
  %949 = vmatprep.subr.bf16.mxu0 %v907
  %950 = vmatpush1.bf16.msra.mxu0 %v906
  %951 = vmatprep.subr.bf16.mxu0 %v910
  %952 = vmatpush1.bf16.msra.mxu0 %v909
  %953 = vmatprep.subr.bf16.mxu0 %v913
  %954 = vmatpush1.bf16.msra.mxu0 %v912
  %955 = vmatprep.subr.bf16.mxu0 0
  %956 = vmatpush1.bf16.msra.mxu0 0
  %957 = vmatprep.subr.bf16.mxu0 0
  %958 = vmatpush1.bf16.msra.mxu0 0
  %959 = vmatprep.subr.bf16.mxu0 0
  %960 = vmatpush1.bf16.msra.mxu0 0
  %961 = vmatprep.subr.bf16.mxu0 0
  %962 = vmatpush1.bf16.msra.mxu0 0
  %963 = vmatprep.subr.bf16.mxu0 0
  %964 = vmatpush1.bf16.msra.mxu0 0
  %965 = vmatprep.subr.bf16.mxu0 0
  %966 = vmatpush1.bf16.msra.mxu0 0
  %967 = vmatprep.subr.bf16.mxu0 0
  %968 = vmatpush1.bf16.msra.mxu0 0
  %969 = vmatprep.subr.bf16.mxu0 0
  %970 = vmatpush1.bf16.msra.mxu0 0
  %971 = vmatprep.mubr.bf16.mxu0 0
  %972 = vmatmul.mubr.bf16.gmra.mrb[0].mxu0 %v758
  %v973 = vpop.f32.mrb[0].mxu0
  %v974 = vadd.f32 %v799, %v973
  %v975 = vpop.f32.mrb[0].mxu0
  %v976 = vadd.f32 %v803, %v975
  %v977 = vpop.f32.mrb[0].mxu0
  %v978 = vadd.f32 %v799, %v977
  %v979 = vpop.f32.mrb[0].mxu0
  %v980 = vadd.f32 %v803, %v979
  %981 = vmatprep.mubr.bf16.mxu0 0
  %982 = vmatmul.mubr.bf16.gmra.mrb[0].mxu0 %v759
  %v983 = vpop.f32.mrb[0].mxu0
  %v984 = vadd.f32 %v799, %v983
  %v985 = vpop.f32.mrb[0].mxu0
  %v986 = vadd.f32 %v803, %v985
  %v987 = vpop.f32.mrb[0].mxu0
  %v988 = vadd.f32 %v799, %v987
  %v989 = vpop.f32.mrb[0].mxu0
  %v990 = vadd.f32 %v803, %v989
  %991 = vmatprep.mubr.bf16.mxu0 0
  %992 = vmatmul.mubr.bf16.gmra.mrb[0].mxu0 %v760
  %v993 = vpop.f32.mrb[0].mxu0
  %v994 = vadd.f32 %v799, %v993
  %v995 = vpop.f32.mrb[0].mxu0
  %v996 = vadd.f32 %v803, %v995
  %v997 = vpop.f32.mrb[0].mxu0
  %v998 = vadd.f32 %v799, %v997
  %v999 = vpop.f32.mrb[0].mxu0
  %v1000 = vadd.f32 %v803, %v999
  %1001 = vmatprep.mubr.bf16.mxu0 0
  %1002 = vmatmul.mubr.bf16.gmra.mrb[0].mxu0 %v761
  %v1003 = vpop.f32.mrb[0].mxu0
  %v1004 = vadd.f32 %v799, %v1003
  %v1005 = vpop.f32.mrb[0].mxu0
  %v1006 = vadd.f32 %v803, %v1005
  %v1007 = vpop.f32.mrb[0].mxu0
  %v1008 = vadd.f32 %v799, %v1007
  %v1009 = vpop.f32.mrb[0].mxu0
  %v1010 = vadd.f32 %v803, %v1009
  %1011 = vdwg.mxu0
  %1012 = vmatprep.subr.bf16.mxu0 0
  %1013 = vmatpush1.bf16.msra.mxu0 %v893
  %1014 = vmatprep.subr.bf16.mxu0 0
  %1015 = vmatpush1.bf16.msra.mxu0 %v896
  %1016 = vmatprep.subr.bf16.mxu0 0
  %1017 = vmatpush1.bf16.msra.mxu0 %v899
  %1018 = vmatprep.subr.bf16.mxu0 0
  %1019 = vmatpush1.bf16.msra.mxu0 %v902
  %1020 = vmatprep.subr.bf16.mxu0 0
  %1021 = vmatpush1.bf16.msra.mxu0 %v905
  %1022 = vmatprep.subr.bf16.mxu0 0
  %1023 = vmatpush1.bf16.msra.mxu0 %v908
  %1024 = vmatprep.subr.bf16.mxu0 0
  %1025 = vmatpush1.bf16.msra.mxu0 %v911
  %1026 = vmatprep.subr.bf16.mxu0 0
  %1027 = vmatpush1.bf16.msra.mxu0 %v914
  %1028 = vmatprep.subr.bf16.mxu0 0
  %1029 = vmatpush1.bf16.msra.mxu0 0
  %1030 = vmatprep.subr.bf16.mxu0 0
  %1031 = vmatpush1.bf16.msra.mxu0 0
  %1032 = vmatprep.subr.bf16.mxu0 0
  %1033 = vmatpush1.bf16.msra.mxu0 0
  %1034 = vmatprep.subr.bf16.mxu0 0
  %1035 = vmatpush1.bf16.msra.mxu0 0
  %1036 = vmatprep.subr.bf16.mxu0 0
  %1037 = vmatpush1.bf16.msra.mxu0 0
  %1038 = vmatprep.subr.bf16.mxu0 0
  %1039 = vmatpush1.bf16.msra.mxu0 0
  %1040 = vmatprep.subr.bf16.mxu0 0
  %1041 = vmatpush1.bf16.msra.mxu0 0
  %1042 = vmatprep.subr.bf16.mxu0 0
  %1043 = vmatpush1.bf16.msra.mxu0 0
  %1044 = vmatprep.mubr.bf16.mxu0 0
  %1045 = vmatmul.mubr.bf16.gmra.mrb[0].mxu0 %v758
  %v1046 = vpop.f32.mrb[0].mxu0
  %v1047 = vadd.f32 %v807, %v1046
  %v1048 = vpop.f32.mrb[0].mxu0
  %v1049 = vpop.f32.mrb[0].mxu0
  %v1050 = vadd.f32 %v807, %v1049
  %v1051 = vpop.f32.mrb[0].mxu0
  %1052 = vmatprep.mubr.bf16.mxu0 0
  %1053 = vmatmul.mubr.bf16.gmra.mrb[0].mxu0 %v759
  %v1054 = vpop.f32.mrb[0].mxu0
  %v1055 = vadd.f32 %v807, %v1054
  %v1056 = vpop.f32.mrb[0].mxu0
  %v1057 = vpop.f32.mrb[0].mxu0
  %v1058 = vadd.f32 %v807, %v1057
  %v1059 = vpop.f32.mrb[0].mxu0
  %1060 = vmatprep.mubr.bf16.mxu0 0
  %1061 = vmatmul.mubr.bf16.gmra.mrb[0].mxu0 %v760
  %v1062 = vpop.f32.mrb[0].mxu0
  %v1063 = vadd.f32 %v807, %v1062
  %v1064 = vpop.f32.mrb[0].mxu0
  %v1065 = vpop.f32.mrb[0].mxu0
  %v1066 = vadd.f32 %v807, %v1065
  %v1067 = vpop.f32.mrb[0].mxu0
  %1068 = vmatprep.mubr.bf16.mxu0 0
  %1069 = vmatmul.mubr.bf16.gmra.mrb[0].mxu0 %v761
  %v1070 = vpop.f32.mrb[0].mxu0
  %v1071 = vadd.f32 %v807, %v1070
  %v1072 = vpop.f32.mrb[0].mxu0
  %v1073 = vpop.f32.mrb[0].mxu0
  %v1074 = vadd.f32 %v807, %v1073
  %v1075 = vpop.f32.mrb[0].mxu0
  %1076 = vdwg.mxu0
  %1077 = vst [vmem:[#allocation2] sm:$0xff] %v974
  %1078 = vst [vmem:[#allocation2 + $0x8] sm:$0xff] %v976
  %1079 = vst [vmem:[#allocation2 + $0x10] sm:$0xff] %v1047
  %1080 = vst [vmem:[#allocation2 + $0x18] sm:$0xff] %v978
  %1081 = vst [vmem:[#allocation2 + $0x20] sm:$0xff] %v980
  %1082 = vst [vmem:[#allocation2 + $0x28] sm:$0xff] %v1050
  %1083 = vst [vmem:[#allocation2 + $0x30] sm:$0xff] %v984
  %1084 = vst [vmem:[#allocation2 + $0x38] sm:$0xff] %v986
  %1085 = vst [vmem:[#allocation2 + $0x40] sm:$0xff] %v1055
  %1086 = vst [vmem:[#allocation2 + $0x48] sm:$0xff] %v988
  %1087 = vst [vmem:[#allocation2 + $0x50] sm:$0xff] %v990
  %1088 = vst [vmem:[#allocation2 + $0x58] sm:$0xff] %v1058
  %1089 = vst [vmem:[#allocation2 + $0x60] sm:$0xff] %v994
  %1090 = vst [vmem:[#allocation2 + $0x68] sm:$0xff] %v996
  %1091 = vst [vmem:[#allocation2 + $0x70] sm:$0xff] %v1063
  %1092 = vst [vmem:[#allocation2 + $0x78] sm:$0xff] %v998
  %1093 = vst [vmem:[#allocation2 + $0x80] sm:$0xff] %v1000
  %1094 = vst [vmem:[#allocation2 + $0x88] sm:$0xff] %v1066
  %1095 = vst [vmem:[#allocation2 + $0x90] sm:$0xff] %v1004
  %1096 = vst [vmem:[#allocation2 + $0x98] sm:$0xff] %v1006
  %1097 = vst [vmem:[#allocation2 + $0xa0] sm:$0xff] %v1071
  %1098 = vst [vmem:[#allocation2 + $0xa8] sm:$0xff] %v1008
  %1099 = vst [vmem:[#allocation2 + $0xb0] sm:$0xff] %v1010
  %1100 = vst [vmem:[#allocation2 + $0xb8] sm:$0xff] %v1074
  %v1101 = vld [vmem:[%s5] sm:$0xff]
  %v1102 = vld [vmem:[%s5 + $0x8] sm:$0xf]
  %v1103 = vld [vmem:[%s5 + $0xc] sm:$0xff]
  %v1104 = vld [vmem:[%s5 + $0x14] sm:$0xf]
  %v1105 = vld [vmem:[%s5 + $0x18] sm:$0xff]
  %v1106 = vld [vmem:[%s5 + $0x20] sm:$0xf]
  %v1107 = vld [vmem:[%s5 + $0x24] sm:$0xff]
  %v1108 = vld [vmem:[%s5 + $0x2c] sm:$0xf]
  %v1109 = vld [vmem:[%s5 + $0x30] sm:$0xff]
  %v1110 = vld [vmem:[%s5 + $0x38] sm:$0xf]
  %v1111 = vld [vmem:[%s5 + $0x3c] sm:$0xff]
  %v1112 = vld [vmem:[%s5 + $0x44] sm:$0xf]
  %v1113 = vld [vmem:[%s5 + $0x48] sm:$0xff]
  %v1114 = vld [vmem:[%s5 + $0x50] sm:$0xf]
  %v1115 = vld [vmem:[%s5 + $0x54] sm:$0xff]
  %v1116 = vld [vmem:[%s5 + $0x5c] sm:$0xf]
  %v1117 = vld [vmem:[%s5 + $0x60] sm:$0xff]
  %v1118 = vld [vmem:[%s5 + $0x68] sm:$0xf]
  %v1119 = vld [vmem:[%s5 + $0x6c] sm:$0xff]
  %v1120 = vld [vmem:[%s5 + $0x74] sm:$0xf]
  %v1121 = vld [vmem:[%s5 + $0x78] sm:$0xff]
  %v1122 = vld [vmem:[%s5 + $0x80] sm:$0xf]
  %v1123 = vld [vmem:[%s5 + $0x84] sm:$0xff]
  %v1124 = vld [vmem:[%s5 + $0x8c] sm:$0xf]
  %v1125 = vld [vmem:[%s5 + $0x90] sm:$0xff]
  %v1126 = vld [vmem:[%s5 + $0x98] sm:$0xf]
  %v1127 = vld [vmem:[%s5 + $0x9c] sm:$0xff]
  %v1128 = vld [vmem:[%s5 + $0xa4] sm:$0xf]
  %v1129 = vld [vmem:[%s5 + $0xa8] sm:$0xff]
  %v1130 = vld [vmem:[%s5 + $0xb0] sm:$0xf]
  %v1131 = vld [vmem:[%s5 + $0xb4] sm:$0xff]
  %v1132 = vld [vmem:[%s5 + $0xbc] sm:$0xf]
  %v1133 = vld [vmem:[%s7] sm:$0x7]
  %s1134 = smul.u32 0, 3
  %s1135 = smul.addr %s1134, 8
  %s1136 = scalar_lea.vmem [#allocation2], %s1135
  %v1137 = vld [vmem:[%s1136] sm:$0xff]
  %v1138 = vld [vmem:[%s1136 + $0x8] sm:$0xff]
  %v1139 = vld [vmem:[%s1136 + $0x10] sm:$0xff]
  %v1141 = vlaneseq
  %v1142 = vshrl.u32 %v1141, 7
  %v1143 = vsub.s32 0, %v1142
  %v1144 = vrot.slane %v1133, %v1143
  %v1145 = vlaneseq
  %v1146 = vshrl.u32 %v1145, 7
  %v1147 = vsub.s32 1, %v1146
  %v1148 = vrot.slane %v1133, %v1147
  %v1149 = vlaneseq
  %v1150 = vshrl.u32 %v1149, 7
  %v1151 = vsub.s32 2, %v1150
  %v1152 = vrot.slane %v1133, %v1151
  %v1188 = vunpack.c.l.b16 %v1101
  %v1189 = vunpack.c.h.b16 %v1101
  %v1190 = vunpack.c.l.b16 %v1102
  %v1191 = vunpack.c.l.b16 %v1103
  %v1192 = vunpack.c.h.b16 %v1103
  %v1193 = vunpack.c.l.b16 %v1104
  %v1194 = vunpack.c.l.b16 %v1105
  %v1195 = vunpack.c.h.b16 %v1105
  %v1196 = vunpack.c.l.b16 %v1106
  %v1197 = vunpack.c.l.b16 %v1107
  %v1198 = vunpack.c.h.b16 %v1107
  %v1199 = vunpack.c.l.b16 %v1108
  %v1200 = vunpack.c.l.b16 %v1109
  %v1201 = vunpack.c.h.b16 %v1109
  %v1202 = vunpack.c.l.b16 %v1110
  %v1203 = vunpack.c.l.b16 %v1111
  %v1204 = vunpack.c.h.b16 %v1111
  %v1205 = vunpack.c.l.b16 %v1112
  %v1206 = vunpack.c.l.b16 %v1113
  %v1207 = vunpack.c.h.b16 %v1113
  %v1208 = vunpack.c.l.b16 %v1114
  %v1209 = vunpack.c.l.b16 %v1115
  %v1210 = vunpack.c.h.b16 %v1115
  %v1211 = vunpack.c.l.b16 %v1116
  %v1212 = vunpack.c.l.b16 %v1117
  %v1213 = vunpack.c.h.b16 %v1117
  %v1214 = vunpack.c.l.b16 %v1118
  %v1215 = vunpack.c.l.b16 %v1119
  %v1216 = vunpack.c.h.b16 %v1119
  %v1217 = vunpack.c.l.b16 %v1120
  %v1218 = vunpack.c.l.b16 %v1121
  %v1219 = vunpack.c.h.b16 %v1121
  %v1220 = vunpack.c.l.b16 %v1122
  %v1221 = vunpack.c.l.b16 %v1123
  %v1222 = vunpack.c.h.b16 %v1123
  %v1223 = vunpack.c.l.b16 %v1124
  %v1224 = vunpack.c.l.b16 %v1125
  %v1225 = vunpack.c.h.b16 %v1125
  %v1226 = vunpack.c.l.b16 %v1126
  %v1227 = vunpack.c.l.b16 %v1127
  %v1228 = vunpack.c.h.b16 %v1127
  %v1229 = vunpack.c.l.b16 %v1128
  %v1230 = vunpack.c.l.b16 %v1129
  %v1231 = vunpack.c.h.b16 %v1129
  %v1232 = vunpack.c.l.b16 %v1130
  %v1233 = vunpack.c.l.b16 %v1131
  %v1234 = vunpack.c.h.b16 %v1131
  %v1235 = vunpack.c.l.b16 %v1132
  %v1236 = vpack.c.b16 %v1191, %v1188
  %v1237 = vpack.c.b16 %v1192, %v1189
  %v1238 = vpack.c.b16 %v1193, %v1190
  %v1239 = vpack.c.b16 %v1197, %v1194
  %v1240 = vpack.c.b16 %v1198, %v1195
  %v1241 = vpack.c.b16 %v1199, %v1196
  %v1242 = vpack.c.b16 %v1203, %v1200
  %v1243 = vpack.c.b16 %v1204, %v1201
  %v1244 = vpack.c.b16 %v1205, %v1202
  %v1245 = vpack.c.b16 %v1209, %v1206
  %v1246 = vpack.c.b16 %v1210, %v1207
  %v1247 = vpack.c.b16 %v1211, %v1208
  %v1248 = vpack.c.b16 %v1215, %v1212
  %v1249 = vpack.c.b16 %v1216, %v1213
  %v1250 = vpack.c.b16 %v1217, %v1214
  %v1251 = vpack.c.b16 %v1221, %v1218
  %v1252 = vpack.c.b16 %v1222, %v1219
  %v1253 = vpack.c.b16 %v1223, %v1220
  %v1254 = vpack.c.b16 %v1227, %v1224
  %v1255 = vpack.c.b16 %v1228, %v1225
  %v1256 = vpack.c.b16 %v1229, %v1226
  %v1257 = vpack.c.b16 %v1233, %v1230
  %v1258 = vpack.c.b16 %v1234, %v1231
  %v1259 = vpack.c.b16 %v1235, %v1232
  %1284 = vmatprep.subr.bf16.mxu0 %v1237
  %1285 = vmatpush1.bf16.msra.mxu0 %v1236
  %1286 = vmatprep.subr.bf16.mxu0 %v1240
  %1287 = vmatpush1.bf16.msra.mxu0 %v1239
  %1288 = vmatprep.subr.bf16.mxu0 %v1243
  %1289 = vmatpush1.bf16.msra.mxu0 %v1242
  %1290 = vmatprep.subr.bf16.mxu0 %v1246
  %1291 = vmatpush1.bf16.msra.mxu0 %v1245
  %1292 = vmatprep.subr.bf16.mxu0 %v1249
  %1293 = vmatpush1.bf16.msra.mxu0 %v1248
  %1294 = vmatprep.subr.bf16.mxu0 %v1252
  %1295 = vmatpush1.bf16.msra.mxu0 %v1251
  %1296 = vmatprep.subr.bf16.mxu0 %v1255
  %1297 = vmatpush1.bf16.msra.mxu0 %v1254
  %1298 = vmatprep.subr.bf16.mxu0 %v1258
  %1299 = vmatpush1.bf16.msra.mxu0 %v1257
  %1300 = vmatprep.subr.bf16.mxu0 0
  %1301 = vmatpush1.bf16.msra.mxu0 0
  %1302 = vmatprep.subr.bf16.mxu0 0
  %1303 = vmatpush1.bf16.msra.mxu0 0
  %1304 = vmatprep.subr.bf16.mxu0 0
  %1305 = vmatpush1.bf16.msra.mxu0 0
  %1306 = vmatprep.subr.bf16.mxu0 0
  %1307 = vmatpush1.bf16.msra.mxu0 0
  %1308 = vmatprep.subr.bf16.mxu0 0
  %1309 = vmatpush1.bf16.msra.mxu0 0
  %1310 = vmatprep.subr.bf16.mxu0 0
  %1311 = vmatpush1.bf16.msra.mxu0 0
  %1312 = vmatprep.subr.bf16.mxu0 0
  %1313 = vmatpush1.bf16.msra.mxu0 0
  %1314 = vmatprep.subr.bf16.mxu0 0
  %1315 = vmatpush1.bf16.msra.mxu0 0
  %1316 = vmatprep.mubr.bf16.mxu0 0
  %1317 = vmatmul.mubr.bf16.gmra.mrb[0].mxu0 0
  %v1318 = vpop.f32.mrb[0].mxu0
  %v1319 = vadd.f32 %v1144, %v1318
  %v1320 = vpop.f32.mrb[0].mxu0
  %v1321 = vadd.f32 %v1148, %v1320
  %v1322 = vpop.f32.mrb[0].mxu0
  %v1323 = vpop.f32.mrb[0].mxu0
  %1324 = vdwg.mxu0
  %1325 = vmatprep.subr.bf16.mxu0 0
  %1326 = vmatpush1.bf16.msra.mxu0 %v1238
  %1327 = vmatprep.subr.bf16.mxu0 0
  %1328 = vmatpush1.bf16.msra.mxu0 %v1241
  %1329 = vmatprep.subr.bf16.mxu0 0
  %1330 = vmatpush1.bf16.msra.mxu0 %v1244
  %1331 = vmatprep.subr.bf16.mxu0 0
  %1332 = vmatpush1.bf16.msra.mxu0 %v1247
  %1333 = vmatprep.subr.bf16.mxu0 0
  %1334 = vmatpush1.bf16.msra.mxu0 %v1250
  %1335 = vmatprep.subr.bf16.mxu0 0
  %1336 = vmatpush1.bf16.msra.mxu0 %v1253
  %1337 = vmatprep.subr.bf16.mxu0 0
  %1338 = vmatpush1.bf16.msra.mxu0 %v1256
  %1339 = vmatprep.subr.bf16.mxu0 0
  %1340 = vmatpush1.bf16.msra.mxu0 %v1259
  %1341 = vmatprep.subr.bf16.mxu0 0
  %1342 = vmatpush1.bf16.msra.mxu0 0
  %1343 = vmatprep.subr.bf16.mxu0 0
  %1344 = vmatpush1.bf16.msra.mxu0 0
  %1345 = vmatprep.subr.bf16.mxu0 0
  %1346 = vmatpush1.bf16.msra.mxu0 0
  %1347 = vmatprep.subr.bf16.mxu0 0
  %1348 = vmatpush1.bf16.msra.mxu0 0
  %1349 = vmatprep.subr.bf16.mxu0 0
  %1350 = vmatpush1.bf16.msra.mxu0 0
  %1351 = vmatprep.subr.bf16.mxu0 0
  %1352 = vmatpush1.bf16.msra.mxu0 0
  %1353 = vmatprep.subr.bf16.mxu0 0
  %1354 = vmatpush1.bf16.msra.mxu0 0
  %1355 = vmatprep.subr.bf16.mxu0 0
  %1356 = vmatpush1.bf16.msra.mxu0 0
  %1357 = vmatprep.mubr.bf16.mxu0 0
  %1358 = vmatmul.mubr.bf16.gmra.mrb[0].mxu0 0
  %v1359 = vpop.f32.mrb[0].mxu0
  %v1360 = vadd.f32 %v1152, %v1359
  %v1361 = vpop.f32.mrb[0].mxu0
  %v1362 = vpop.f32.mrb[0].mxu0
  %v1363 = vpop.f32.mrb[0].mxu0
  %1364 = vdwg.mxu0
  %v1365 = vadd.f32 %v1137, %v1319
  %v1366 = vxor.u32 %v1365, 2147483648
  %v1367 = vmul.f32 %v1366, 1.442695
  %v1368 = vpow.pop %v1367
  %v1369 = vadd.f32 %v1368, 1.0
  %v1370 = vrcp.pop %v1369
  %v1371 = vmul.f32 1.0, %v1370
  %v1372 = vadd.f32 %v1138, %v1321
  %v1373 = vxor.u32 %v1372, 2147483648
  %v1374 = vmul.f32 %v1373, 1.442695
  %v1375 = vpow.pop %v1374
  %v1376 = vadd.f32 %v1375, 1.0
  %v1377 = vrcp.pop %v1376
  %v1378 = vmul.f32 1.0, %v1377
  %v1379 = vmul.f32 %v1371, %v1360
  %v1380 = vadd.f32 %v1139, %v1379
  %v1381 = vtanh.pop %v1380
  %v1382 = vsub.f32 1.0, %v1378
  %v1383 = vmul.f32 %v1382, %v1381
  %v1384 = vmul.f32 %v1378, 0.0
  %v1385 = vadd.f32 %v1383, %v1384
  %s1386 = smul.u32 1, 3
  %s1387 = smul.addr %s1386, 8
  %s1388 = scalar_lea.vmem [#allocation2], %s1387
  %v1389 = vld [vmem:[%s1388] sm:$0xff]
  %v1390 = vld [vmem:[%s1388 + $0x8] sm:$0xff]
  %v1391 = vld [vmem:[%s1388 + $0x10] sm:$0xff]
  %v1392 = vpack.c.bf16 %v1385, %v1385
  %1393 = vmatprep.subr.bf16.mxu0 %v1237
  %1394 = vmatpush1.bf16.msra.mxu0 %v1236
  %1395 = vmatprep.subr.bf16.mxu0 %v1240
  %1396 = vmatpush1.bf16.msra.mxu0 %v1239
  %1397 = vmatprep.subr.bf16.mxu0 %v1243
  %1398 = vmatpush1.bf16.msra.mxu0 %v1242
  %1399 = vmatprep.subr.bf16.mxu0 %v1246
  %1400 = vmatpush1.bf16.msra.mxu0 %v1245
  %1401 = vmatprep.subr.bf16.mxu0 %v1249
  %1402 = vmatpush1.bf16.msra.mxu0 %v1248
  %1403 = vmatprep.subr.bf16.mxu0 %v1252
  %1404 = vmatpush1.bf16.msra.mxu0 %v1251
  %1405 = vmatprep.subr.bf16.mxu0 %v1255
  %1406 = vmatpush1.bf16.msra.mxu0 %v1254
  %1407 = vmatprep.subr.bf16.mxu0 %v1258
  %1408 = vmatpush1.bf16.msra.mxu0 %v1257
  %1409 = vmatprep.subr.bf16.mxu0 0
  %1410 = vmatpush1.bf16.msra.mxu0 0
  %1411 = vmatprep.subr.bf16.mxu0 0
  %1412 = vmatpush1.bf16.msra.mxu0 0
  %1413 = vmatprep.subr.bf16.mxu0 0
  %1414 = vmatpush1.bf16.msra.mxu0 0
  %1415 = vmatprep.subr.bf16.mxu0 0
  %1416 = vmatpush1.bf16.msra.mxu0 0
  %1417 = vmatprep.subr.bf16.mxu0 0
  %1418 = vmatpush1.bf16.msra.mxu0 0
  %1419 = vmatprep.subr.bf16.mxu0 0
  %1420 = vmatpush1.bf16.msra.mxu0 0
  %1421 = vmatprep.subr.bf16.mxu0 0
  %1422 = vmatpush1.bf16.msra.mxu0 0
  %1423 = vmatprep.subr.bf16.mxu0 0
  %1424 = vmatpush1.bf16.msra.mxu0 0
  %1425 = vmatprep.mubr.bf16.mxu0 0
  %1426 = vmatmul.mubr.bf16.gmra.mrb[0].mxu0 %v1392
  %v1427 = vpop.f32.mrb[0].mxu0
  %v1428 = vadd.f32 %v1144, %v1427
  %v1429 = vpop.f32.mrb[0].mxu0
  %v1430 = vadd.f32 %v1148, %v1429
  %v1431 = vpop.f32.mrb[0].mxu0
  %v1432 = vpop.f32.mrb[0].mxu0
  %1433 = vdwg.mxu0
  %1434 = vmatprep.subr.bf16.mxu0 0
  %1435 = vmatpush1.bf16.msra.mxu0 %v1238
  %1436 = vmatprep.subr.bf16.mxu0 0
  %1437 = vmatpush1.bf16.msra.mxu0 %v1241
  %1438 = vmatprep.subr.bf16.mxu0 0
  %1439 = vmatpush1.bf16.msra.mxu0 %v1244
  %1440 = vmatprep.subr.bf16.mxu0 0
  %1441 = vmatpush1.bf16.msra.mxu0 %v1247
  %1442 = vmatprep.subr.bf16.mxu0 0
  %1443 = vmatpush1.bf16.msra.mxu0 %v1250
  %1444 = vmatprep.subr.bf16.mxu0 0
  %1445 = vmatpush1.bf16.msra.mxu0 %v1253
  %1446 = vmatprep.subr.bf16.mxu0 0
  %1447 = vmatpush1.bf16.msra.mxu0 %v1256
  %1448 = vmatprep.subr.bf16.mxu0 0
  %1449 = vmatpush1.bf16.msra.mxu0 %v1259
  %1450 = vmatprep.subr.bf16.mxu0 0
  %1451 = vmatpush1.bf16.msra.mxu0 0
  %1452 = vmatprep.subr.bf16.mxu0 0
  %1453 = vmatpush1.bf16.msra.mxu0 0
  %1454 = vmatprep.subr.bf16.mxu0 0
  %1455 = vmatpush1.bf16.msra.mxu0 0
  %1456 = vmatprep.subr.bf16.mxu0 0
  %1457 = vmatpush1.bf16.msra.mxu0 0
  %1458 = vmatprep.subr.bf16.mxu0 0
  %1459 = vmatpush1.bf16.msra.mxu0 0
  %1460 = vmatprep.subr.bf16.mxu0 0
  %1461 = vmatpush1.bf16.msra.mxu0 0
  %1462 = vmatprep.subr.bf16.mxu0 0
  %1463 = vmatpush1.bf16.msra.mxu0 0
  %1464 = vmatprep.subr.bf16.mxu0 0
  %1465 = vmatpush1.bf16.msra.mxu0 0
  %1466 = vmatprep.mubr.bf16.mxu0 0
  %1467 = vmatmul.mubr.bf16.gmra.mrb[0].mxu0 %v1392
  %v1468 = vpop.f32.mrb[0].mxu0
  %v1469 = vadd.f32 %v1152, %v1468
  %v1470 = vpop.f32.mrb[0].mxu0
  %v1471 = vpop.f32.mrb[0].mxu0
  %v1472 = vpop.f32.mrb[0].mxu0
  %1473 = vdwg.mxu0
  %v1474 = vadd.f32 %v1389, %v1428
  %v1475 = vxor.u32 %v1474, 2147483648
  %v1476 = vmul.f32 %v1475, 1.442695
  %v1477 = vpow.pop %v1476
  %v1478 = vadd.f32 %v1477, 1.0
  %v1479 = vrcp.pop %v1478
  %v1480 = vmul.f32 1.0, %v1479
  %v1481 = vadd.f32 %v1390, %v1430
  %v1482 = vxor.u32 %v1481, 2147483648
  %v1483 = vmul.f32 %v1482, 1.442695
  %v1484 = vpow.pop %v1483
  %v1485 = vadd.f32 %v1484, 1.0
  %v1486 = vrcp.pop %v1485
  %v1487 = vmul.f32 1.0, %v1486
  %v1488 = vmul.f32 %v1480, %v1469
  %v1489 = vadd.f32 %v1391, %v1488
  %v1490 = vtanh.pop %v1489
  %v1491 = vsub.f32 1.0, %v1487
  %v1492 = vmul.f32 %v1491, %v1490
  %v1493 = vmul.f32 %v1487, %v1385
  %v1494 = vadd.f32 %v1492, %v1493
  %s1495 = smul.u32 2, 3
  %s1496 = smul.addr %s1495, 8
  %s1497 = scalar_lea.vmem [#allocation2], %s1496
  %v1498 = vld [vmem:[%s1497] sm:$0xff]
  %v1499 = vld [vmem:[%s1497 + $0x8] sm:$0xff]
  %v1500 = vld [vmem:[%s1497 + $0x10] sm:$0xff]
  %v1501 = vpack.c.bf16 %v1494, %v1494
  %1502 = vmatprep.subr.bf16.mxu0 %v1237
  %1503 = vmatpush1.bf16.msra.mxu0 %v1236
  %1504 = vmatprep.subr.bf16.mxu0 %v1240
  %1505 = vmatpush1.bf16.msra.mxu0 %v1239
  %1506 = vmatprep.subr.bf16.mxu0 %v1243
  %1507 = vmatpush1.bf16.msra.mxu0 %v1242
  %1508 = vmatprep.subr.bf16.mxu0 %v1246
  %1509 = vmatpush1.bf16.msra.mxu0 %v1245
  %1510 = vmatprep.subr.bf16.mxu0 %v1249
  %1511 = vmatpush1.bf16.msra.mxu0 %v1248
  %1512 = vmatprep.subr.bf16.mxu0 %v1252
  %1513 = vmatpush1.bf16.msra.mxu0 %v1251
  %1514 = vmatprep.subr.bf16.mxu0 %v1255
  %1515 = vmatpush1.bf16.msra.mxu0 %v1254
  %1516 = vmatprep.subr.bf16.mxu0 %v1258
  %1517 = vmatpush1.bf16.msra.mxu0 %v1257
  %1518 = vmatprep.subr.bf16.mxu0 0
  %1519 = vmatpush1.bf16.msra.mxu0 0
  %1520 = vmatprep.subr.bf16.mxu0 0
  %1521 = vmatpush1.bf16.msra.mxu0 0
  %1522 = vmatprep.subr.bf16.mxu0 0
  %1523 = vmatpush1.bf16.msra.mxu0 0
  %1524 = vmatprep.subr.bf16.mxu0 0
  %1525 = vmatpush1.bf16.msra.mxu0 0
  %1526 = vmatprep.subr.bf16.mxu0 0
  %1527 = vmatpush1.bf16.msra.mxu0 0
  %1528 = vmatprep.subr.bf16.mxu0 0
  %1529 = vmatpush1.bf16.msra.mxu0 0
  %1530 = vmatprep.subr.bf16.mxu0 0
  %1531 = vmatpush1.bf16.msra.mxu0 0
  %1532 = vmatprep.subr.bf16.mxu0 0
  %1533 = vmatpush1.bf16.msra.mxu0 0
  %1534 = vmatprep.mubr.bf16.mxu0 0
  %1535 = vmatmul.mubr.bf16.gmra.mrb[0].mxu0 %v1501
  %v1536 = vpop.f32.mrb[0].mxu0
  %v1537 = vadd.f32 %v1144, %v1536
  %v1538 = vpop.f32.mrb[0].mxu0
  %v1539 = vadd.f32 %v1148, %v1538
  %v1540 = vpop.f32.mrb[0].mxu0
  %v1541 = vpop.f32.mrb[0].mxu0
  %1542 = vdwg.mxu0
  %1543 = vmatprep.subr.bf16.mxu0 0
  %1544 = vmatpush1.bf16.msra.mxu0 %v1238
  %1545 = vmatprep.subr.bf16.mxu0 0
  %1546 = vmatpush1.bf16.msra.mxu0 %v1241
  %1547 = vmatprep.subr.bf16.mxu0 0
  %1548 = vmatpush1.bf16.msra.mxu0 %v1244
  %1549 = vmatprep.subr.bf16.mxu0 0
  %1550 = vmatpush1.bf16.msra.mxu0 %v1247
  %1551 = vmatprep.subr.bf16.mxu0 0
  %1552 = vmatpush1.bf16.msra.mxu0 %v1250
  %1553 = vmatprep.subr.bf16.mxu0 0
  %1554 = vmatpush1.bf16.msra.mxu0 %v1253
  %1555 = vmatprep.subr.bf16.mxu0 0
  %1556 = vmatpush1.bf16.msra.mxu0 %v1256
  %1557 = vmatprep.subr.bf16.mxu0 0
  %1558 = vmatpush1.bf16.msra.mxu0 %v1259
  %1559 = vmatprep.subr.bf16.mxu0 0
  %1560 = vmatpush1.bf16.msra.mxu0 0
  %1561 = vmatprep.subr.bf16.mxu0 0
  %1562 = vmatpush1.bf16.msra.mxu0 0
  %1563 = vmatprep.subr.bf16.mxu0 0
  %1564 = vmatpush1.bf16.msra.mxu0 0
  %1565 = vmatprep.subr.bf16.mxu0 0
  %1566 = vmatpush1.bf16.msra.mxu0 0
  %1567 = vmatprep.subr.bf16.mxu0 0
  %1568 = vmatpush1.bf16.msra.mxu0 0
  %1569 = vmatprep.subr.bf16.mxu0 0
  %1570 = vmatpush1.bf16.msra.mxu0 0
  %1571 = vmatprep.subr.bf16.mxu0 0
  %1572 = vmatpush1.bf16.msra.mxu0 0
  %1573 = vmatprep.subr.bf16.mxu0 0
  %1574 = vmatpush1.bf16.msra.mxu0 0
  %1575 = vmatprep.mubr.bf16.mxu0 0
  %1576 = vmatmul.mubr.bf16.gmra.mrb[0].mxu0 %v1501
  %v1577 = vpop.f32.mrb[0].mxu0
  %v1578 = vadd.f32 %v1152, %v1577
  %v1579 = vpop.f32.mrb[0].mxu0
  %v1580 = vpop.f32.mrb[0].mxu0
  %v1581 = vpop.f32.mrb[0].mxu0
  %1582 = vdwg.mxu0
  %v1583 = vadd.f32 %v1498, %v1537
  %v1584 = vxor.u32 %v1583, 2147483648
  %v1585 = vmul.f32 %v1584, 1.442695
  %v1586 = vpow.pop %v1585
  %v1587 = vadd.f32 %v1586, 1.0
  %v1588 = vrcp.pop %v1587
  %v1589 = vmul.f32 1.0, %v1588
  %v1590 = vadd.f32 %v1499, %v1539
  %v1591 = vxor.u32 %v1590, 2147483648
  %v1592 = vmul.f32 %v1591, 1.442695
  %v1593 = vpow.pop %v1592
  %v1594 = vadd.f32 %v1593, 1.0
  %v1595 = vrcp.pop %v1594
  %v1596 = vmul.f32 1.0, %v1595
  %v1597 = vmul.f32 %v1589, %v1578
  %v1598 = vadd.f32 %v1500, %v1597
  %v1599 = vtanh.pop %v1598
  %v1600 = vsub.f32 1.0, %v1596
  %v1601 = vmul.f32 %v1600, %v1599
  %v1602 = vmul.f32 %v1596, %v1494
  %v1603 = vadd.f32 %v1601, %v1602
  %s1604 = smul.u32 3, 3
  %s1605 = smul.addr %s1604, 8
  %s1606 = scalar_lea.vmem [#allocation2], %s1605
  %v1607 = vld [vmem:[%s1606] sm:$0xff]
  %v1608 = vld [vmem:[%s1606 + $0x8] sm:$0xff]
  %v1609 = vld [vmem:[%s1606 + $0x10] sm:$0xff]
  %v1610 = vpack.c.bf16 %v1603, %v1603
  %1611 = vmatprep.subr.bf16.mxu0 %v1237
  %1612 = vmatpush1.bf16.msra.mxu0 %v1236
  %1613 = vmatprep.subr.bf16.mxu0 %v1240
  %1614 = vmatpush1.bf16.msra.mxu0 %v1239
  %1615 = vmatprep.subr.bf16.mxu0 %v1243
  %1616 = vmatpush1.bf16.msra.mxu0 %v1242
  %1617 = vmatprep.subr.bf16.mxu0 %v1246
  %1618 = vmatpush1.bf16.msra.mxu0 %v1245
  %1619 = vmatprep.subr.bf16.mxu0 %v1249
  %1620 = vmatpush1.bf16.msra.mxu0 %v1248
  %1621 = vmatprep.subr.bf16.mxu0 %v1252
  %1622 = vmatpush1.bf16.msra.mxu0 %v1251
  %1623 = vmatprep.subr.bf16.mxu0 %v1255
  %1624 = vmatpush1.bf16.msra.mxu0 %v1254
  %1625 = vmatprep.subr.bf16.mxu0 %v1258
  %1626 = vmatpush1.bf16.msra.mxu0 %v1257
  %1627 = vmatprep.subr.bf16.mxu0 0
  %1628 = vmatpush1.bf16.msra.mxu0 0
  %1629 = vmatprep.subr.bf16.mxu0 0
  %1630 = vmatpush1.bf16.msra.mxu0 0
  %1631 = vmatprep.subr.bf16.mxu0 0
  %1632 = vmatpush1.bf16.msra.mxu0 0
  %1633 = vmatprep.subr.bf16.mxu0 0
  %1634 = vmatpush1.bf16.msra.mxu0 0
  %1635 = vmatprep.subr.bf16.mxu0 0
  %1636 = vmatpush1.bf16.msra.mxu0 0
  %1637 = vmatprep.subr.bf16.mxu0 0
  %1638 = vmatpush1.bf16.msra.mxu0 0
  %1639 = vmatprep.subr.bf16.mxu0 0
  %1640 = vmatpush1.bf16.msra.mxu0 0
  %1641 = vmatprep.subr.bf16.mxu0 0
  %1642 = vmatpush1.bf16.msra.mxu0 0
  %1643 = vmatprep.mubr.bf16.mxu0 0
  %1644 = vmatmul.mubr.bf16.gmra.mrb[0].mxu0 %v1610
  %v1645 = vpop.f32.mrb[0].mxu0
  %v1646 = vadd.f32 %v1144, %v1645
  %v1647 = vpop.f32.mrb[0].mxu0
  %v1648 = vadd.f32 %v1148, %v1647
  %v1649 = vpop.f32.mrb[0].mxu0
  %v1650 = vpop.f32.mrb[0].mxu0
  %1651 = vdwg.mxu0
  %1652 = vmatprep.subr.bf16.mxu0 0
  %1653 = vmatpush1.bf16.msra.mxu0 %v1238
  %1654 = vmatprep.subr.bf16.mxu0 0
  %1655 = vmatpush1.bf16.msra.mxu0 %v1241
  %1656 = vmatprep.subr.bf16.mxu0 0
  %1657 = vmatpush1.bf16.msra.mxu0 %v1244
  %1658 = vmatprep.subr.bf16.mxu0 0
  %1659 = vmatpush1.bf16.msra.mxu0 %v1247
  %1660 = vmatprep.subr.bf16.mxu0 0
  %1661 = vmatpush1.bf16.msra.mxu0 %v1250
  %1662 = vmatprep.subr.bf16.mxu0 0
  %1663 = vmatpush1.bf16.msra.mxu0 %v1253
  %1664 = vmatprep.subr.bf16.mxu0 0
  %1665 = vmatpush1.bf16.msra.mxu0 %v1256
  %1666 = vmatprep.subr.bf16.mxu0 0
  %1667 = vmatpush1.bf16.msra.mxu0 %v1259
  %1668 = vmatprep.subr.bf16.mxu0 0
  %1669 = vmatpush1.bf16.msra.mxu0 0
  %1670 = vmatprep.subr.bf16.mxu0 0
  %1671 = vmatpush1.bf16.msra.mxu0 0
  %1672 = vmatprep.subr.bf16.mxu0 0
  %1673 = vmatpush1.bf16.msra.mxu0 0
  %1674 = vmatprep.subr.bf16.mxu0 0
  %1675 = vmatpush1.bf16.msra.mxu0 0
  %1676 = vmatprep.subr.bf16.mxu0 0
  %1677 = vmatpush1.bf16.msra.mxu0 0
  %1678 = vmatprep.subr.bf16.mxu0 0
  %1679 = vmatpush1.bf16.msra.mxu0 0
  %1680 = vmatprep.subr.bf16.mxu0 0
  %1681 = vmatpush1.bf16.msra.mxu0 0
  %1682 = vmatprep.subr.bf16.mxu0 0
  %1683 = vmatpush1.bf16.msra.mxu0 0
  %1684 = vmatprep.mubr.bf16.mxu0 0
  %1685 = vmatmul.mubr.bf16.gmra.mrb[0].mxu0 %v1610
  %v1686 = vpop.f32.mrb[0].mxu0
  %v1687 = vadd.f32 %v1152, %v1686
  %v1688 = vpop.f32.mrb[0].mxu0
  %v1689 = vpop.f32.mrb[0].mxu0
  %v1690 = vpop.f32.mrb[0].mxu0
  %1691 = vdwg.mxu0
  %v1692 = vadd.f32 %v1607, %v1646
  %v1693 = vxor.u32 %v1692, 2147483648
  %v1694 = vmul.f32 %v1693, 1.442695
  %v1695 = vpow.pop %v1694
  %v1696 = vadd.f32 %v1695, 1.0
  %v1697 = vrcp.pop %v1696
  %v1698 = vmul.f32 1.0, %v1697
  %v1699 = vadd.f32 %v1608, %v1648
  %v1700 = vxor.u32 %v1699, 2147483648
  %v1701 = vmul.f32 %v1700, 1.442695
  %v1702 = vpow.pop %v1701
  %v1703 = vadd.f32 %v1702, 1.0
  %v1704 = vrcp.pop %v1703
  %v1705 = vmul.f32 1.0, %v1704
  %v1706 = vmul.f32 %v1698, %v1687
  %v1707 = vadd.f32 %v1609, %v1706
  %v1708 = vtanh.pop %v1707
  %v1709 = vsub.f32 1.0, %v1705
  %v1710 = vmul.f32 %v1709, %v1708
  %v1711 = vmul.f32 %v1705, %v1603
  %v1712 = vadd.f32 %v1710, %v1711
  %s1713 = smul.u32 4, 3
  %s1714 = smul.addr %s1713, 8
  %s1715 = scalar_lea.vmem [#allocation2], %s1714
  %v1716 = vld [vmem:[%s1715] sm:$0xff]
  %v1717 = vld [vmem:[%s1715 + $0x8] sm:$0xff]
  %v1718 = vld [vmem:[%s1715 + $0x10] sm:$0xff]
  %v1719 = vpack.c.bf16 %v1712, %v1712
  %1720 = vmatprep.subr.bf16.mxu0 %v1237
  %1721 = vmatpush1.bf16.msra.mxu0 %v1236
  %1722 = vmatprep.subr.bf16.mxu0 %v1240
  %1723 = vmatpush1.bf16.msra.mxu0 %v1239
  %1724 = vmatprep.subr.bf16.mxu0 %v1243
  %1725 = vmatpush1.bf16.msra.mxu0 %v1242
  %1726 = vmatprep.subr.bf16.mxu0 %v1246
  %1727 = vmatpush1.bf16.msra.mxu0 %v1245
  %1728 = vmatprep.subr.bf16.mxu0 %v1249
  %1729 = vmatpush1.bf16.msra.mxu0 %v1248
  %1730 = vmatprep.subr.bf16.mxu0 %v1252
  %1731 = vmatpush1.bf16.msra.mxu0 %v1251
  %1732 = vmatprep.subr.bf16.mxu0 %v1255
  %1733 = vmatpush1.bf16.msra.mxu0 %v1254
  %1734 = vmatprep.subr.bf16.mxu0 %v1258
  %1735 = vmatpush1.bf16.msra.mxu0 %v1257
  %1736 = vmatprep.subr.bf16.mxu0 0
  %1737 = vmatpush1.bf16.msra.mxu0 0
  %1738 = vmatprep.subr.bf16.mxu0 0
  %1739 = vmatpush1.bf16.msra.mxu0 0
  %1740 = vmatprep.subr.bf16.mxu0 0
  %1741 = vmatpush1.bf16.msra.mxu0 0
  %1742 = vmatprep.subr.bf16.mxu0 0
  %1743 = vmatpush1.bf16.msra.mxu0 0
  %1744 = vmatprep.subr.bf16.mxu0 0
  %1745 = vmatpush1.bf16.msra.mxu0 0
  %1746 = vmatprep.subr.bf16.mxu0 0
  %1747 = vmatpush1.bf16.msra.mxu0 0
  %1748 = vmatprep.subr.bf16.mxu0 0
  %1749 = vmatpush1.bf16.msra.mxu0 0
  %1750 = vmatprep.subr.bf16.mxu0 0
  %1751 = vmatpush1.bf16.msra.mxu0 0
  %1752 = vmatprep.mubr.bf16.mxu0 0
  %1753 = vmatmul.mubr.bf16.gmra.mrb[0].mxu0 %v1719
  %v1754 = vpop.f32.mrb[0].mxu0
  %v1755 = vadd.f32 %v1144, %v1754
  %v1756 = vpop.f32.mrb[0].mxu0
  %v1757 = vadd.f32 %v1148, %v1756
  %v1758 = vpop.f32.mrb[0].mxu0
  %v1759 = vpop.f32.mrb[0].mxu0
  %1760 = vdwg.mxu0
  %1761 = vmatprep.subr.bf16.mxu0 0
  %1762 = vmatpush1.bf16.msra.mxu0 %v1238
  %1763 = vmatprep.subr.bf16.mxu0 0
  %1764 = vmatpush1.bf16.msra.mxu0 %v1241
  %1765 = vmatprep.subr.bf16.mxu0 0
  %1766 = vmatpush1.bf16.msra.mxu0 %v1244
  %1767 = vmatprep.subr.bf16.mxu0 0
  %1768 = vmatpush1.bf16.msra.mxu0 %v1247
  %1769 = vmatprep.subr.bf16.mxu0 0
  %1770 = vmatpush1.bf16.msra.mxu0 %v1250
  %1771 = vmatprep.subr.bf16.mxu0 0
  %1772 = vmatpush1.bf16.msra.mxu0 %v1253
  %1773 = vmatprep.subr.bf16.mxu0 0
  %1774 = vmatpush1.bf16.msra.mxu0 %v1256
  %1775 = vmatprep.subr.bf16.mxu0 0
  %1776 = vmatpush1.bf16.msra.mxu0 %v1259
  %1777 = vmatprep.subr.bf16.mxu0 0
  %1778 = vmatpush1.bf16.msra.mxu0 0
  %1779 = vmatprep.subr.bf16.mxu0 0
  %1780 = vmatpush1.bf16.msra.mxu0 0
  %1781 = vmatprep.subr.bf16.mxu0 0
  %1782 = vmatpush1.bf16.msra.mxu0 0
  %1783 = vmatprep.subr.bf16.mxu0 0
  %1784 = vmatpush1.bf16.msra.mxu0 0
  %1785 = vmatprep.subr.bf16.mxu0 0
  %1786 = vmatpush1.bf16.msra.mxu0 0
  %1787 = vmatprep.subr.bf16.mxu0 0
  %1788 = vmatpush1.bf16.msra.mxu0 0
  %1789 = vmatprep.subr.bf16.mxu0 0
  %1790 = vmatpush1.bf16.msra.mxu0 0
  %1791 = vmatprep.subr.bf16.mxu0 0
  %1792 = vmatpush1.bf16.msra.mxu0 0
  %1793 = vmatprep.mubr.bf16.mxu0 0
  %1794 = vmatmul.mubr.bf16.gmra.mrb[0].mxu0 %v1719
  %v1795 = vpop.f32.mrb[0].mxu0
  %v1796 = vadd.f32 %v1152, %v1795
  %v1797 = vpop.f32.mrb[0].mxu0
  %v1798 = vpop.f32.mrb[0].mxu0
  %v1799 = vpop.f32.mrb[0].mxu0
  %1800 = vdwg.mxu0
  %v1801 = vadd.f32 %v1716, %v1755
  %v1802 = vxor.u32 %v1801, 2147483648
  %v1803 = vmul.f32 %v1802, 1.442695
  %v1804 = vpow.pop %v1803
  %v1805 = vadd.f32 %v1804, 1.0
  %v1806 = vrcp.pop %v1805
  %v1807 = vmul.f32 1.0, %v1806
  %v1808 = vadd.f32 %v1717, %v1757
  %v1809 = vxor.u32 %v1808, 2147483648
  %v1810 = vmul.f32 %v1809, 1.442695
  %v1811 = vpow.pop %v1810
  %v1812 = vadd.f32 %v1811, 1.0
  %v1813 = vrcp.pop %v1812
  %v1814 = vmul.f32 1.0, %v1813
  %v1815 = vmul.f32 %v1807, %v1796
  %v1816 = vadd.f32 %v1718, %v1815
  %v1817 = vtanh.pop %v1816
  %v1818 = vsub.f32 1.0, %v1814
  %v1819 = vmul.f32 %v1818, %v1817
  %v1820 = vmul.f32 %v1814, %v1712
  %v1821 = vadd.f32 %v1819, %v1820
  %s1822 = smul.u32 5, 3
  %s1823 = smul.addr %s1822, 8
  %s1824 = scalar_lea.vmem [#allocation2], %s1823
  %v1825 = vld [vmem:[%s1824] sm:$0xff]
  %v1826 = vld [vmem:[%s1824 + $0x8] sm:$0xff]
  %v1827 = vld [vmem:[%s1824 + $0x10] sm:$0xff]
  %v1828 = vpack.c.bf16 %v1821, %v1821
  %1829 = vmatprep.subr.bf16.mxu0 %v1237
  %1830 = vmatpush1.bf16.msra.mxu0 %v1236
  %1831 = vmatprep.subr.bf16.mxu0 %v1240
  %1832 = vmatpush1.bf16.msra.mxu0 %v1239
  %1833 = vmatprep.subr.bf16.mxu0 %v1243
  %1834 = vmatpush1.bf16.msra.mxu0 %v1242
  %1835 = vmatprep.subr.bf16.mxu0 %v1246
  %1836 = vmatpush1.bf16.msra.mxu0 %v1245
  %1837 = vmatprep.subr.bf16.mxu0 %v1249
  %1838 = vmatpush1.bf16.msra.mxu0 %v1248
  %1839 = vmatprep.subr.bf16.mxu0 %v1252
  %1840 = vmatpush1.bf16.msra.mxu0 %v1251
  %1841 = vmatprep.subr.bf16.mxu0 %v1255
  %1842 = vmatpush1.bf16.msra.mxu0 %v1254
  %1843 = vmatprep.subr.bf16.mxu0 %v1258
  %1844 = vmatpush1.bf16.msra.mxu0 %v1257
  %1845 = vmatprep.subr.bf16.mxu0 0
  %1846 = vmatpush1.bf16.msra.mxu0 0
  %1847 = vmatprep.subr.bf16.mxu0 0
  %1848 = vmatpush1.bf16.msra.mxu0 0
  %1849 = vmatprep.subr.bf16.mxu0 0
  %1850 = vmatpush1.bf16.msra.mxu0 0
  %1851 = vmatprep.subr.bf16.mxu0 0
  %1852 = vmatpush1.bf16.msra.mxu0 0
  %1853 = vmatprep.subr.bf16.mxu0 0
  %1854 = vmatpush1.bf16.msra.mxu0 0
  %1855 = vmatprep.subr.bf16.mxu0 0
  %1856 = vmatpush1.bf16.msra.mxu0 0
  %1857 = vmatprep.subr.bf16.mxu0 0
  %1858 = vmatpush1.bf16.msra.mxu0 0
  %1859 = vmatprep.subr.bf16.mxu0 0
  %1860 = vmatpush1.bf16.msra.mxu0 0
  %1861 = vmatprep.mubr.bf16.mxu0 0
  %1862 = vmatmul.mubr.bf16.gmra.mrb[0].mxu0 %v1828
  %v1863 = vpop.f32.mrb[0].mxu0
  %v1864 = vadd.f32 %v1144, %v1863
  %v1865 = vpop.f32.mrb[0].mxu0
  %v1866 = vadd.f32 %v1148, %v1865
  %v1867 = vpop.f32.mrb[0].mxu0
  %v1868 = vpop.f32.mrb[0].mxu0
  %1869 = vdwg.mxu0
  %1870 = vmatprep.subr.bf16.mxu0 0
  %1871 = vmatpush1.bf16.msra.mxu0 %v1238
  %1872 = vmatprep.subr.bf16.mxu0 0
  %1873 = vmatpush1.bf16.msra.mxu0 %v1241
  %1874 = vmatprep.subr.bf16.mxu0 0
  %1875 = vmatpush1.bf16.msra.mxu0 %v1244
  %1876 = vmatprep.subr.bf16.mxu0 0
  %1877 = vmatpush1.bf16.msra.mxu0 %v1247
  %1878 = vmatprep.subr.bf16.mxu0 0
  %1879 = vmatpush1.bf16.msra.mxu0 %v1250
  %1880 = vmatprep.subr.bf16.mxu0 0
  %1881 = vmatpush1.bf16.msra.mxu0 %v1253
  %1882 = vmatprep.subr.bf16.mxu0 0
  %1883 = vmatpush1.bf16.msra.mxu0 %v1256
  %1884 = vmatprep.subr.bf16.mxu0 0
  %1885 = vmatpush1.bf16.msra.mxu0 %v1259
  %1886 = vmatprep.subr.bf16.mxu0 0
  %1887 = vmatpush1.bf16.msra.mxu0 0
  %1888 = vmatprep.subr.bf16.mxu0 0
  %1889 = vmatpush1.bf16.msra.mxu0 0
  %1890 = vmatprep.subr.bf16.mxu0 0
  %1891 = vmatpush1.bf16.msra.mxu0 0
  %1892 = vmatprep.subr.bf16.mxu0 0
  %1893 = vmatpush1.bf16.msra.mxu0 0
  %1894 = vmatprep.subr.bf16.mxu0 0
  %1895 = vmatpush1.bf16.msra.mxu0 0
  %1896 = vmatprep.subr.bf16.mxu0 0
  %1897 = vmatpush1.bf16.msra.mxu0 0
  %1898 = vmatprep.subr.bf16.mxu0 0
  %1899 = vmatpush1.bf16.msra.mxu0 0
  %1900 = vmatprep.subr.bf16.mxu0 0
  %1901 = vmatpush1.bf16.msra.mxu0 0
  %1902 = vmatprep.mubr.bf16.mxu0 0
  %1903 = vmatmul.mubr.bf16.gmra.mrb[0].mxu0 %v1828
  %v1904 = vpop.f32.mrb[0].mxu0
  %v1905 = vadd.f32 %v1152, %v1904
  %v1906 = vpop.f32.mrb[0].mxu0
  %v1907 = vpop.f32.mrb[0].mxu0
  %v1908 = vpop.f32.mrb[0].mxu0
  %1909 = vdwg.mxu0
  %v1910 = vadd.f32 %v1825, %v1864
  %v1911 = vxor.u32 %v1910, 2147483648
  %v1912 = vmul.f32 %v1911, 1.442695
  %v1913 = vpow.pop %v1912
  %v1914 = vadd.f32 %v1913, 1.0
  %v1915 = vrcp.pop %v1914
  %v1916 = vmul.f32 1.0, %v1915
  %v1917 = vadd.f32 %v1826, %v1866
  %v1918 = vxor.u32 %v1917, 2147483648
  %v1919 = vmul.f32 %v1918, 1.442695
  %v1920 = vpow.pop %v1919
  %v1921 = vadd.f32 %v1920, 1.0
  %v1922 = vrcp.pop %v1921
  %v1923 = vmul.f32 1.0, %v1922
  %v1924 = vmul.f32 %v1916, %v1905
  %v1925 = vadd.f32 %v1827, %v1924
  %v1926 = vtanh.pop %v1925
  %v1927 = vsub.f32 1.0, %v1923
  %v1928 = vmul.f32 %v1927, %v1926
  %v1929 = vmul.f32 %v1923, %v1821
  %v1930 = vadd.f32 %v1928, %v1929
  %s1931 = smul.u32 6, 3
  %s1932 = smul.addr %s1931, 8
  %s1933 = scalar_lea.vmem [#allocation2], %s1932
  %v1934 = vld [vmem:[%s1933] sm:$0xff]
  %v1935 = vld [vmem:[%s1933 + $0x8] sm:$0xff]
  %v1936 = vld [vmem:[%s1933 + $0x10] sm:$0xff]
  %v1937 = vpack.c.bf16 %v1930, %v1930
  %1938 = vmatprep.subr.bf16.mxu0 %v1237
  %1939 = vmatpush1.bf16.msra.mxu0 %v1236
  %1940 = vmatprep.subr.bf16.mxu0 %v1240
  %1941 = vmatpush1.bf16.msra.mxu0 %v1239
  %1942 = vmatprep.subr.bf16.mxu0 %v1243
  %1943 = vmatpush1.bf16.msra.mxu0 %v1242
  %1944 = vmatprep.subr.bf16.mxu0 %v1246
  %1945 = vmatpush1.bf16.msra.mxu0 %v1245
  %1946 = vmatprep.subr.bf16.mxu0 %v1249
  %1947 = vmatpush1.bf16.msra.mxu0 %v1248
  %1948 = vmatprep.subr.bf16.mxu0 %v1252
  %1949 = vmatpush1.bf16.msra.mxu0 %v1251
  %1950 = vmatprep.subr.bf16.mxu0 %v1255
  %1951 = vmatpush1.bf16.msra.mxu0 %v1254
  %1952 = vmatprep.subr.bf16.mxu0 %v1258
  %1953 = vmatpush1.bf16.msra.mxu0 %v1257
  %1954 = vmatprep.subr.bf16.mxu0 0
  %1955 = vmatpush1.bf16.msra.mxu0 0
  %1956 = vmatprep.subr.bf16.mxu0 0
  %1957 = vmatpush1.bf16.msra.mxu0 0
  %1958 = vmatprep.subr.bf16.mxu0 0
  %1959 = vmatpush1.bf16.msra.mxu0 0
  %1960 = vmatprep.subr.bf16.mxu0 0
  %1961 = vmatpush1.bf16.msra.mxu0 0
  %1962 = vmatprep.subr.bf16.mxu0 0
  %1963 = vmatpush1.bf16.msra.mxu0 0
  %1964 = vmatprep.subr.bf16.mxu0 0
  %1965 = vmatpush1.bf16.msra.mxu0 0
  %1966 = vmatprep.subr.bf16.mxu0 0
  %1967 = vmatpush1.bf16.msra.mxu0 0
  %1968 = vmatprep.subr.bf16.mxu0 0
  %1969 = vmatpush1.bf16.msra.mxu0 0
  %1970 = vmatprep.mubr.bf16.mxu0 0
  %1971 = vmatmul.mubr.bf16.gmra.mrb[0].mxu0 %v1937
  %v1972 = vpop.f32.mrb[0].mxu0
  %v1973 = vadd.f32 %v1144, %v1972
  %v1974 = vpop.f32.mrb[0].mxu0
  %v1975 = vadd.f32 %v1148, %v1974
  %v1976 = vpop.f32.mrb[0].mxu0
  %v1977 = vpop.f32.mrb[0].mxu0
  %1978 = vdwg.mxu0
  %1979 = vmatprep.subr.bf16.mxu0 0
  %1980 = vmatpush1.bf16.msra.mxu0 %v1238
  %1981 = vmatprep.subr.bf16.mxu0 0
  %1982 = vmatpush1.bf16.msra.mxu0 %v1241
  %1983 = vmatprep.subr.bf16.mxu0 0
  %1984 = vmatpush1.bf16.msra.mxu0 %v1244
  %1985 = vmatprep.subr.bf16.mxu0 0
  %1986 = vmatpush1.bf16.msra.mxu0 %v1247
  %1987 = vmatprep.subr.bf16.mxu0 0
  %1988 = vmatpush1.bf16.msra.mxu0 %v1250
  %1989 = vmatprep.subr.bf16.mxu0 0
  %1990 = vmatpush1.bf16.msra.mxu0 %v1253
  %1991 = vmatprep.subr.bf16.mxu0 0
  %1992 = vmatpush1.bf16.msra.mxu0 %v1256
  %1993 = vmatprep.subr.bf16.mxu0 0
  %1994 = vmatpush1.bf16.msra.mxu0 %v1259
  %1995 = vmatprep.subr.bf16.mxu0 0
  %1996 = vmatpush1.bf16.msra.mxu0 0
  %1997 = vmatprep.subr.bf16.mxu0 0
  %1998 = vmatpush1.bf16.msra.mxu0 0
  %1999 = vmatprep.subr.bf16.mxu0 0
  %2000 = vmatpush1.bf16.msra.mxu0 0
  %2001 = vmatprep.subr.bf16.mxu0 0
  %2002 = vmatpush1.bf16.msra.mxu0 0
  %2003 = vmatprep.subr.bf16.mxu0 0
  %2004 = vmatpush1.bf16.msra.mxu0 0
  %2005 = vmatprep.subr.bf16.mxu0 0
  %2006 = vmatpush1.bf16.msra.mxu0 0
  %2007 = vmatprep.subr.bf16.mxu0 0
  %2008 = vmatpush1.bf16.msra.mxu0 0
  %2009 = vmatprep.subr.bf16.mxu0 0
  %2010 = vmatpush1.bf16.msra.mxu0 0
  %2011 = vmatprep.mubr.bf16.mxu0 0
  %2012 = vmatmul.mubr.bf16.gmra.mrb[0].mxu0 %v1937
  %v2013 = vpop.f32.mrb[0].mxu0
  %v2014 = vadd.f32 %v1152, %v2013
  %v2015 = vpop.f32.mrb[0].mxu0
  %v2016 = vpop.f32.mrb[0].mxu0
  %v2017 = vpop.f32.mrb[0].mxu0
  %2018 = vdwg.mxu0
  %v2019 = vadd.f32 %v1934, %v1973
  %v2020 = vxor.u32 %v2019, 2147483648
  %v2021 = vmul.f32 %v2020, 1.442695
  %v2022 = vpow.pop %v2021
  %v2023 = vadd.f32 %v2022, 1.0
  %v2024 = vrcp.pop %v2023
  %v2025 = vmul.f32 1.0, %v2024
  %v2026 = vadd.f32 %v1935, %v1975
  %v2027 = vxor.u32 %v2026, 2147483648
  %v2028 = vmul.f32 %v2027, 1.442695
  %v2029 = vpow.pop %v2028
  %v2030 = vadd.f32 %v2029, 1.0
  %v2031 = vrcp.pop %v2030
  %v2032 = vmul.f32 1.0, %v2031
  %v2033 = vmul.f32 %v2025, %v2014
  %v2034 = vadd.f32 %v1936, %v2033
  %v2035 = vtanh.pop %v2034
  %v2036 = vsub.f32 1.0, %v2032
  %v2037 = vmul.f32 %v2036, %v2035
  %v2038 = vmul.f32 %v2032, %v1930
  %v2039 = vadd.f32 %v2037, %v2038
  %s2040 = smul.u32 7, 3
  %s2041 = smul.addr %s2040, 8
  %s2042 = scalar_lea.vmem [#allocation2], %s2041
  %v2043 = vld [vmem:[%s2042] sm:$0xff]
  %v2044 = vld [vmem:[%s2042 + $0x8] sm:$0xff]
  %v2045 = vld [vmem:[%s2042 + $0x10] sm:$0xff]
  %v2046 = vpack.c.bf16 %v2039, %v2039
  %2047 = vmatprep.subr.bf16.mxu0 %v1237
  %2048 = vmatpush1.bf16.msra.mxu0 %v1236
  %2049 = vmatprep.subr.bf16.mxu0 %v1240
  %2050 = vmatpush1.bf16.msra.mxu0 %v1239
  %2051 = vmatprep.subr.bf16.mxu0 %v1243
  %2052 = vmatpush1.bf16.msra.mxu0 %v1242
  %2053 = vmatprep.subr.bf16.mxu0 %v1246
  %2054 = vmatpush1.bf16.msra.mxu0 %v1245
  %2055 = vmatprep.subr.bf16.mxu0 %v1249
  %2056 = vmatpush1.bf16.msra.mxu0 %v1248
  %2057 = vmatprep.subr.bf16.mxu0 %v1252
  %2058 = vmatpush1.bf16.msra.mxu0 %v1251
  %2059 = vmatprep.subr.bf16.mxu0 %v1255
  %2060 = vmatpush1.bf16.msra.mxu0 %v1254
  %2061 = vmatprep.subr.bf16.mxu0 %v1258
  %2062 = vmatpush1.bf16.msra.mxu0 %v1257
  %2063 = vmatprep.subr.bf16.mxu0 0
  %2064 = vmatpush1.bf16.msra.mxu0 0
  %2065 = vmatprep.subr.bf16.mxu0 0
  %2066 = vmatpush1.bf16.msra.mxu0 0
  %2067 = vmatprep.subr.bf16.mxu0 0
  %2068 = vmatpush1.bf16.msra.mxu0 0
  %2069 = vmatprep.subr.bf16.mxu0 0
  %2070 = vmatpush1.bf16.msra.mxu0 0
  %2071 = vmatprep.subr.bf16.mxu0 0
  %2072 = vmatpush1.bf16.msra.mxu0 0
  %2073 = vmatprep.subr.bf16.mxu0 0
  %2074 = vmatpush1.bf16.msra.mxu0 0
  %2075 = vmatprep.subr.bf16.mxu0 0
  %2076 = vmatpush1.bf16.msra.mxu0 0
  %2077 = vmatprep.subr.bf16.mxu0 0
  %2078 = vmatpush1.bf16.msra.mxu0 0
  %2079 = vmatprep.mubr.bf16.mxu0 0
  %2080 = vmatmul.mubr.bf16.gmra.mrb[0].mxu0 %v2046
  %v2081 = vpop.f32.mrb[0].mxu0
  %v2082 = vadd.f32 %v1144, %v2081
  %v2083 = vpop.f32.mrb[0].mxu0
  %v2084 = vadd.f32 %v1148, %v2083
  %v2085 = vpop.f32.mrb[0].mxu0
  %v2086 = vpop.f32.mrb[0].mxu0
  %2087 = vdwg.mxu0
  %2088 = vmatprep.subr.bf16.mxu0 0
  %2089 = vmatpush1.bf16.msra.mxu0 %v1238
  %2090 = vmatprep.subr.bf16.mxu0 0
  %2091 = vmatpush1.bf16.msra.mxu0 %v1241
  %2092 = vmatprep.subr.bf16.mxu0 0
  %2093 = vmatpush1.bf16.msra.mxu0 %v1244
  %2094 = vmatprep.subr.bf16.mxu0 0
  %2095 = vmatpush1.bf16.msra.mxu0 %v1247
  %2096 = vmatprep.subr.bf16.mxu0 0
  %2097 = vmatpush1.bf16.msra.mxu0 %v1250
  %2098 = vmatprep.subr.bf16.mxu0 0
  %2099 = vmatpush1.bf16.msra.mxu0 %v1253
  %2100 = vmatprep.subr.bf16.mxu0 0
  %2101 = vmatpush1.bf16.msra.mxu0 %v1256
  %2102 = vmatprep.subr.bf16.mxu0 0
  %2103 = vmatpush1.bf16.msra.mxu0 %v1259
  %2104 = vmatprep.subr.bf16.mxu0 0
  %2105 = vmatpush1.bf16.msra.mxu0 0
  %2106 = vmatprep.subr.bf16.mxu0 0
  %2107 = vmatpush1.bf16.msra.mxu0 0
  %2108 = vmatprep.subr.bf16.mxu0 0
  %2109 = vmatpush1.bf16.msra.mxu0 0
  %2110 = vmatprep.subr.bf16.mxu0 0
  %2111 = vmatpush1.bf16.msra.mxu0 0
  %2112 = vmatprep.subr.bf16.mxu0 0
  %2113 = vmatpush1.bf16.msra.mxu0 0
  %2114 = vmatprep.subr.bf16.mxu0 0
  %2115 = vmatpush1.bf16.msra.mxu0 0
  %2116 = vmatprep.subr.bf16.mxu0 0
  %2117 = vmatpush1.bf16.msra.mxu0 0
  %2118 = vmatprep.subr.bf16.mxu0 0
  %2119 = vmatpush1.bf16.msra.mxu0 0
  %2120 = vmatprep.mubr.bf16.mxu0 0
  %2121 = vmatmul.mubr.bf16.gmra.mrb[0].mxu0 %v2046
  %v2122 = vpop.f32.mrb[0].mxu0
  %v2123 = vadd.f32 %v1152, %v2122
  %v2124 = vpop.f32.mrb[0].mxu0
  %v2125 = vpop.f32.mrb[0].mxu0
  %v2126 = vpop.f32.mrb[0].mxu0
  %2127 = vdwg.mxu0
  %v2128 = vadd.f32 %v2043, %v2082
  %v2129 = vxor.u32 %v2128, 2147483648
  %v2130 = vmul.f32 %v2129, 1.442695
  %v2131 = vpow.pop %v2130
  %v2132 = vadd.f32 %v2131, 1.0
  %v2133 = vrcp.pop %v2132
  %v2134 = vmul.f32 1.0, %v2133
  %v2135 = vadd.f32 %v2044, %v2084
  %v2136 = vxor.u32 %v2135, 2147483648
  %v2137 = vmul.f32 %v2136, 1.442695
  %v2138 = vpow.pop %v2137
  %v2139 = vadd.f32 %v2138, 1.0
  %v2140 = vrcp.pop %v2139
  %v2141 = vmul.f32 1.0, %v2140
  %v2142 = vmul.f32 %v2134, %v2123
  %v2143 = vadd.f32 %v2045, %v2142
  %v2144 = vtanh.pop %v2143
  %v2145 = vsub.f32 1.0, %v2141
  %v2146 = vmul.f32 %v2145, %v2144
  %v2147 = vmul.f32 %v2141, %v2039
  %v2148 = vadd.f32 %v2146, %v2147
  %v2149 = vpack.c.bf16 %v2148, %v2148
  %v2150 = vld [vmem:[%s8] sm:$0xf]
  %v2151 = vld [vmem:[%s8 + $0x4] sm:$0xf]
  %v2152 = vld [vmem:[%s8 + $0x8] sm:$0xf]
  %v2153 = vld [vmem:[%s8 + $0xc] sm:$0xf]
  %v2154 = vld [vmem:[%s8 + $0x10] sm:$0xf]
  %v2155 = vld [vmem:[%s8 + $0x14] sm:$0xf]
  %v2156 = vld [vmem:[%s8 + $0x18] sm:$0xf]
  %v2157 = vld [vmem:[%s8 + $0x1c] sm:$0xf]
  %v2158 = vld [vmem:[%s8 + $0x20] sm:$0xf]
  %v2159 = vld [vmem:[%s8 + $0x24] sm:$0xf]
  %v2160 = vld [vmem:[%s8 + $0x28] sm:$0xf]
  %v2161 = vld [vmem:[%s8 + $0x2c] sm:$0xf]
  %v2162 = vld [vmem:[%s8 + $0x30] sm:$0xf]
  %v2163 = vld [vmem:[%s8 + $0x34] sm:$0xf]
  %v2164 = vld [vmem:[%s8 + $0x38] sm:$0xf]
  %v2165 = vld [vmem:[%s8 + $0x3c] sm:$0xf]
  %v2166 = vld [vmem:[%s9] sm:$0x1]
  %v2168 = vlaneseq
  %v2169 = vshrl.u32 %v2168, 7
  %v2170 = vsub.s32 0, %v2169
  %v2171 = vrot.slane %v2166, %v2170
  %v2189 = vunpack.c.l.b16 %v2150
  %v2190 = vunpack.c.l.b16 %v2151
  %v2191 = vunpack.c.l.b16 %v2152
  %v2192 = vunpack.c.l.b16 %v2153
  %v2193 = vunpack.c.l.b16 %v2154
  %v2194 = vunpack.c.l.b16 %v2155
  %v2195 = vunpack.c.l.b16 %v2156
  %v2196 = vunpack.c.l.b16 %v2157
  %v2197 = vunpack.c.l.b16 %v2158
  %v2198 = vunpack.c.l.b16 %v2159
  %v2199 = vunpack.c.l.b16 %v2160
  %v2200 = vunpack.c.l.b16 %v2161
  %v2201 = vunpack.c.l.b16 %v2162
  %v2202 = vunpack.c.l.b16 %v2163
  %v2203 = vunpack.c.l.b16 %v2164
  %v2204 = vunpack.c.l.b16 %v2165
  %v2205 = vpack.c.b16 %v2190, %v2189
  %v2206 = vpack.c.b16 %v2192, %v2191
  %v2207 = vpack.c.b16 %v2194, %v2193
  %v2208 = vpack.c.b16 %v2196, %v2195
  %v2209 = vpack.c.b16 %v2198, %v2197
  %v2210 = vpack.c.b16 %v2200, %v2199
  %v2211 = vpack.c.b16 %v2202, %v2201
  %v2212 = vpack.c.b16 %v2204, %v2203
  %2221 = vmatprep.subr.bf16.mxu0 0
  %2222 = vmatpush1.bf16.msra.mxu0 %v2205
  %2223 = vmatprep.subr.bf16.mxu0 0
  %2224 = vmatpush1.bf16.msra.mxu0 %v2206
  %2225 = vmatprep.subr.bf16.mxu0 0
  %2226 = vmatpush1.bf16.msra.mxu0 %v2207
  %2227 = vmatprep.subr.bf16.mxu0 0
  %2228 = vmatpush1.bf16.msra.mxu0 %v2208
  %2229 = vmatprep.subr.bf16.mxu0 0
  %2230 = vmatpush1.bf16.msra.mxu0 %v2209
  %2231 = vmatprep.subr.bf16.mxu0 0
  %2232 = vmatpush1.bf16.msra.mxu0 %v2210
  %2233 = vmatprep.subr.bf16.mxu0 0
  %2234 = vmatpush1.bf16.msra.mxu0 %v2211
  %2235 = vmatprep.subr.bf16.mxu0 0
  %2236 = vmatpush1.bf16.msra.mxu0 %v2212
  %2237 = vmatprep.subr.bf16.mxu0 0
  %2238 = vmatpush1.bf16.msra.mxu0 0
  %2239 = vmatprep.subr.bf16.mxu0 0
  %2240 = vmatpush1.bf16.msra.mxu0 0
  %2241 = vmatprep.subr.bf16.mxu0 0
  %2242 = vmatpush1.bf16.msra.mxu0 0
  %2243 = vmatprep.subr.bf16.mxu0 0
  %2244 = vmatpush1.bf16.msra.mxu0 0
  %2245 = vmatprep.subr.bf16.mxu0 0
  %2246 = vmatpush1.bf16.msra.mxu0 0
  %2247 = vmatprep.subr.bf16.mxu0 0
  %2248 = vmatpush1.bf16.msra.mxu0 0
  %2249 = vmatprep.subr.bf16.mxu0 0
  %2250 = vmatpush1.bf16.msra.mxu0 0
  %2251 = vmatprep.subr.bf16.mxu0 0
  %2252 = vmatpush1.bf16.msra.mxu0 0
  %2253 = vmatprep.mubr.bf16.mxu0 0
  %2254 = vmatmul.mubr.bf16.gmra.mrb[0].mxu0 %v2149
  %v2255 = vpop.f32.mrb[0].mxu0
  %v2256 = vadd.f32 %v2171, %v2255
  %v2257 = vpop.f32.mrb[0].mxu0
  %v2258 = vpop.f32.mrb[0].mxu0
  %v2259 = vpop.f32.mrb[0].mxu0
  %2260 = vdwg.mxu0
  %v2261 = vtanh.pop %v2256
  %v2262 = vpack.c.bf16 %v749, %v749
  %v2263 = vld [vmem:[%s10] sm:$0xf]
  %v2264 = vld [vmem:[%s10 + $0x4] sm:$0xf]
  %v2265 = vld [vmem:[%s10 + $0x8] sm:$0xf]
  %v2266 = vld [vmem:[%s10 + $0xc] sm:$0xf]
  %v2267 = vld [vmem:[%s10 + $0x10] sm:$0xf]
  %v2268 = vld [vmem:[%s10 + $0x14] sm:$0xf]
  %v2269 = vld [vmem:[%s10 + $0x18] sm:$0xf]
  %v2270 = vld [vmem:[%s10 + $0x1c] sm:$0xf]
  %v2271 = vld [vmem:[%s10 + $0x20] sm:$0xf]
  %v2272 = vld [vmem:[%s10 + $0x24] sm:$0xf]
  %v2273 = vld [vmem:[%s10 + $0x28] sm:$0xf]
  %v2274 = vld [vmem:[%s10 + $0x2c] sm:$0xf]
  %v2275 = vld [vmem:[%s10 + $0x30] sm:$0xf]
  %v2276 = vld [vmem:[%s10 + $0x34] sm:$0xf]
  %v2277 = vld [vmem:[%s10 + $0x38] sm:$0xf]
  %v2278 = vld [vmem:[%s10 + $0x3c] sm:$0xf]
  %v2279 = vld [vmem:[%s11] sm:$0x1]
  %v2281 = vlaneseq
  %v2282 = vshrl.u32 %v2281, 7
  %v2283 = vsub.s32 0, %v2282
  %v2284 = vrot.slane %v2279, %v2283
  %v2302 = vunpack.c.l.b16 %v2263
  %v2303 = vunpack.c.l.b16 %v2264
  %v2304 = vunpack.c.l.b16 %v2265
  %v2305 = vunpack.c.l.b16 %v2266
  %v2306 = vunpack.c.l.b16 %v2267
  %v2307 = vunpack.c.l.b16 %v2268
  %v2308 = vunpack.c.l.b16 %v2269
  %v2309 = vunpack.c.l.b16 %v2270
  %v2310 = vunpack.c.l.b16 %v2271
  %v2311 = vunpack.c.l.b16 %v2272
  %v2312 = vunpack.c.l.b16 %v2273
  %v2313 = vunpack.c.l.b16 %v2274
  %v2314 = vunpack.c.l.b16 %v2275
  %v2315 = vunpack.c.l.b16 %v2276
  %v2316 = vunpack.c.l.b16 %v2277
  %v2317 = vunpack.c.l.b16 %v2278
  %v2318 = vpack.c.b16 %v2303, %v2302
  %v2319 = vpack.c.b16 %v2305, %v2304
  %v2320 = vpack.c.b16 %v2307, %v2306
  %v2321 = vpack.c.b16 %v2309, %v2308
  %v2322 = vpack.c.b16 %v2311, %v2310
  %v2323 = vpack.c.b16 %v2313, %v2312
  %v2324 = vpack.c.b16 %v2315, %v2314
  %v2325 = vpack.c.b16 %v2317, %v2316
  %2334 = vmatprep.subr.bf16.mxu0 0
  %2335 = vmatpush1.bf16.msra.mxu0 %v2318
  %2336 = vmatprep.subr.bf16.mxu0 0
  %2337 = vmatpush1.bf16.msra.mxu0 %v2319
  %2338 = vmatprep.subr.bf16.mxu0 0
  %2339 = vmatpush1.bf16.msra.mxu0 %v2320
  %2340 = vmatprep.subr.bf16.mxu0 0
  %2341 = vmatpush1.bf16.msra.mxu0 %v2321
  %2342 = vmatprep.subr.bf16.mxu0 0
  %2343 = vmatpush1.bf16.msra.mxu0 %v2322
  %2344 = vmatprep.subr.bf16.mxu0 0
  %2345 = vmatpush1.bf16.msra.mxu0 %v2323
  %2346 = vmatprep.subr.bf16.mxu0 0
  %2347 = vmatpush1.bf16.msra.mxu0 %v2324
  %2348 = vmatprep.subr.bf16.mxu0 0
  %2349 = vmatpush1.bf16.msra.mxu0 %v2325
  %2350 = vmatprep.subr.bf16.mxu0 0
  %2351 = vmatpush1.bf16.msra.mxu0 0
  %2352 = vmatprep.subr.bf16.mxu0 0
  %2353 = vmatpush1.bf16.msra.mxu0 0
  %2354 = vmatprep.subr.bf16.mxu0 0
  %2355 = vmatpush1.bf16.msra.mxu0 0
  %2356 = vmatprep.subr.bf16.mxu0 0
  %2357 = vmatpush1.bf16.msra.mxu0 0
  %2358 = vmatprep.subr.bf16.mxu0 0
  %2359 = vmatpush1.bf16.msra.mxu0 0
  %2360 = vmatprep.subr.bf16.mxu0 0
  %2361 = vmatpush1.bf16.msra.mxu0 0
  %2362 = vmatprep.subr.bf16.mxu0 0
  %2363 = vmatpush1.bf16.msra.mxu0 0
  %2364 = vmatprep.subr.bf16.mxu0 0
  %2365 = vmatpush1.bf16.msra.mxu0 0
  %2366 = vmatprep.mubr.bf16.mxu0 0
  %2367 = vmatmul.mubr.bf16.gmra.mrb[0].mxu0 %v2262
  %v2368 = vpop.f32.mrb[0].mxu0
  %v2369 = vadd.f32 %v2284, %v2368
  %v2370 = vpop.f32.mrb[0].mxu0
  %v2371 = vpop.f32.mrb[0].mxu0
  %v2372 = vpop.f32.mrb[0].mxu0
  %2373 = vdwg.mxu0
  %v2374 = vtanh.pop %v2369
  %v2375 = vpack.c.bf16 %v2261, %v2261
  %v2376 = vld [vmem:[%s12] sm:$0xf]
  %v2377 = vld [vmem:[%s12 + $0x4] sm:$0xf]
  %v2378 = vld [vmem:[%s12 + $0x8] sm:$0xf]
  %v2379 = vld [vmem:[%s12 + $0xc] sm:$0xf]
  %v2380 = vld [vmem:[%s12 + $0x10] sm:$0xf]
  %v2381 = vld [vmem:[%s12 + $0x14] sm:$0xf]
  %v2382 = vld [vmem:[%s12 + $0x18] sm:$0xf]
  %v2383 = vld [vmem:[%s12 + $0x1c] sm:$0xf]
  %v2384 = vld [vmem:[%s12 + $0x20] sm:$0xf]
  %v2385 = vld [vmem:[%s12 + $0x24] sm:$0xf]
  %v2386 = vld [vmem:[%s12 + $0x28] sm:$0xf]
  %v2387 = vld [vmem:[%s12 + $0x2c] sm:$0xf]
  %v2388 = vld [vmem:[%s12 + $0x30] sm:$0xf]
  %v2389 = vld [vmem:[%s12 + $0x34] sm:$0xf]
  %v2390 = vld [vmem:[%s12 + $0x38] sm:$0xf]
  %v2391 = vld [vmem:[%s12 + $0x3c] sm:$0xf]
  %v2392 = vld [vmem:[%s13] sm:$0x1]
  %v2394 = vlaneseq
  %v2395 = vshrl.u32 %v2394, 7
  %v2396 = vsub.s32 0, %v2395
  %v2397 = vrot.slane %v2392, %v2396
  %v2415 = vunpack.c.l.b16 %v2376
  %v2416 = vunpack.c.l.b16 %v2377
  %v2417 = vunpack.c.l.b16 %v2378
  %v2418 = vunpack.c.l.b16 %v2379
  %v2419 = vunpack.c.l.b16 %v2380
  %v2420 = vunpack.c.l.b16 %v2381
  %v2421 = vunpack.c.l.b16 %v2382
  %v2422 = vunpack.c.l.b16 %v2383
  %v2423 = vunpack.c.l.b16 %v2384
  %v2424 = vunpack.c.l.b16 %v2385
  %v2425 = vunpack.c.l.b16 %v2386
  %v2426 = vunpack.c.l.b16 %v2387
  %v2427 = vunpack.c.l.b16 %v2388
  %v2428 = vunpack.c.l.b16 %v2389
  %v2429 = vunpack.c.l.b16 %v2390
  %v2430 = vunpack.c.l.b16 %v2391
  %v2431 = vpack.c.b16 %v2416, %v2415
  %v2432 = vpack.c.b16 %v2418, %v2417
  %v2433 = vpack.c.b16 %v2420, %v2419
  %v2434 = vpack.c.b16 %v2422, %v2421
  %v2435 = vpack.c.b16 %v2424, %v2423
  %v2436 = vpack.c.b16 %v2426, %v2425
  %v2437 = vpack.c.b16 %v2428, %v2427
  %v2438 = vpack.c.b16 %v2430, %v2429
  %2447 = vmatprep.subr.bf16.mxu0 0
  %2448 = vmatpush1.bf16.msra.mxu0 %v2431
  %2449 = vmatprep.subr.bf16.mxu0 0
  %2450 = vmatpush1.bf16.msra.mxu0 %v2432
  %2451 = vmatprep.subr.bf16.mxu0 0
  %2452 = vmatpush1.bf16.msra.mxu0 %v2433
  %2453 = vmatprep.subr.bf16.mxu0 0
  %2454 = vmatpush1.bf16.msra.mxu0 %v2434
  %2455 = vmatprep.subr.bf16.mxu0 0
  %2456 = vmatpush1.bf16.msra.mxu0 %v2435
  %2457 = vmatprep.subr.bf16.mxu0 0
  %2458 = vmatpush1.bf16.msra.mxu0 %v2436
  %2459 = vmatprep.subr.bf16.mxu0 0
  %2460 = vmatpush1.bf16.msra.mxu0 %v2437
  %2461 = vmatprep.subr.bf16.mxu0 0
  %2462 = vmatpush1.bf16.msra.mxu0 %v2438
  %2463 = vmatprep.subr.bf16.mxu0 0
  %2464 = vmatpush1.bf16.msra.mxu0 0
  %2465 = vmatprep.subr.bf16.mxu0 0
  %2466 = vmatpush1.bf16.msra.mxu0 0
  %2467 = vmatprep.subr.bf16.mxu0 0
  %2468 = vmatpush1.bf16.msra.mxu0 0
  %2469 = vmatprep.subr.bf16.mxu0 0
  %2470 = vmatpush1.bf16.msra.mxu0 0
  %2471 = vmatprep.subr.bf16.mxu0 0
  %2472 = vmatpush1.bf16.msra.mxu0 0
  %2473 = vmatprep.subr.bf16.mxu0 0
  %2474 = vmatpush1.bf16.msra.mxu0 0
  %2475 = vmatprep.subr.bf16.mxu0 0
  %2476 = vmatpush1.bf16.msra.mxu0 0
  %2477 = vmatprep.subr.bf16.mxu0 0
  %2478 = vmatpush1.bf16.msra.mxu0 0
  %2479 = vmatprep.mubr.bf16.mxu0 0
  %2480 = vmatmul.mubr.bf16.gmra.mrb[0].mxu0 %v2375
  %v2481 = vpop.f32.mrb[0].mxu0
  %v2482 = vadd.f32 %v2397, %v2481
  %v2483 = vpop.f32.mrb[0].mxu0
  %v2484 = vpop.f32.mrb[0].mxu0
  %v2485 = vpop.f32.mrb[0].mxu0
  %2486 = vdwg.mxu0
  %v2487 = vtanh.pop %v2482
  %v2488 = vmul.f32 %v2374, %v2487
  %v2489 = vpack.c.bf16 %v2488, %v2488
  %v2490 = vld [vmem:[%s14] sm:$0xf]
  %v2491 = vld [vmem:[%s14 + $0x4] sm:$0xf]
  %v2492 = vld [vmem:[%s14 + $0x8] sm:$0xf]
  %v2493 = vld [vmem:[%s14 + $0xc] sm:$0xf]
  %v2494 = vld [vmem:[%s14 + $0x10] sm:$0xf]
  %v2495 = vld [vmem:[%s14 + $0x14] sm:$0xf]
  %v2496 = vld [vmem:[%s14 + $0x18] sm:$0xf]
  %v2497 = vld [vmem:[%s14 + $0x1c] sm:$0xf]
  %v2498 = vld [vmem:[%s14 + $0x20] sm:$0xf]
  %v2499 = vld [vmem:[%s14 + $0x24] sm:$0xf]
  %v2500 = vld [vmem:[%s14 + $0x28] sm:$0xf]
  %v2501 = vld [vmem:[%s14 + $0x2c] sm:$0xf]
  %v2502 = vld [vmem:[%s14 + $0x30] sm:$0xf]
  %v2503 = vld [vmem:[%s14 + $0x34] sm:$0xf]
  %v2504 = vld [vmem:[%s14 + $0x38] sm:$0xf]
  %v2505 = vld [vmem:[%s14 + $0x3c] sm:$0xf]
  %v2506 = vld [vmem:[%s15] sm:$0x1]
  %v2508 = vlaneseq
  %v2509 = vshrl.u32 %v2508, 7
  %v2510 = vsub.s32 0, %v2509
  %v2511 = vrot.slane %v2506, %v2510
  %v2529 = vunpack.c.l.b16 %v2490
  %v2530 = vunpack.c.l.b16 %v2491
  %v2531 = vunpack.c.l.b16 %v2492
  %v2532 = vunpack.c.l.b16 %v2493
  %v2533 = vunpack.c.l.b16 %v2494
  %v2534 = vunpack.c.l.b16 %v2495
  %v2535 = vunpack.c.l.b16 %v2496
  %v2536 = vunpack.c.l.b16 %v2497
  %v2537 = vunpack.c.l.b16 %v2498
  %v2538 = vunpack.c.l.b16 %v2499
  %v2539 = vunpack.c.l.b16 %v2500
  %v2540 = vunpack.c.l.b16 %v2501
  %v2541 = vunpack.c.l.b16 %v2502
  %v2542 = vunpack.c.l.b16 %v2503
  %v2543 = vunpack.c.l.b16 %v2504
  %v2544 = vunpack.c.l.b16 %v2505
  %v2545 = vpack.c.b16 %v2530, %v2529
  %v2546 = vpack.c.b16 %v2532, %v2531
  %v2547 = vpack.c.b16 %v2534, %v2533
  %v2548 = vpack.c.b16 %v2536, %v2535
  %v2549 = vpack.c.b16 %v2538, %v2537
  %v2550 = vpack.c.b16 %v2540, %v2539
  %v2551 = vpack.c.b16 %v2542, %v2541
  %v2552 = vpack.c.b16 %v2544, %v2543
  %2561 = vmatprep.subr.bf16.mxu0 0
  %2562 = vmatpush1.bf16.msra.mxu0 %v2545
  %2563 = vmatprep.subr.bf16.mxu0 0
  %2564 = vmatpush1.bf16.msra.mxu0 %v2546
  %2565 = vmatprep.subr.bf16.mxu0 0
  %2566 = vmatpush1.bf16.msra.mxu0 %v2547
  %2567 = vmatprep.subr.bf16.mxu0 0
  %2568 = vmatpush1.bf16.msra.mxu0 %v2548
  %2569 = vmatprep.subr.bf16.mxu0 0
  %2570 = vmatpush1.bf16.msra.mxu0 %v2549
  %2571 = vmatprep.subr.bf16.mxu0 0
  %2572 = vmatpush1.bf16.msra.mxu0 %v2550
  %2573 = vmatprep.subr.bf16.mxu0 0
  %2574 = vmatpush1.bf16.msra.mxu0 %v2551
  %2575 = vmatprep.subr.bf16.mxu0 0
  %2576 = vmatpush1.bf16.msra.mxu0 %v2552
  %2577 = vmatprep.subr.bf16.mxu0 0
  %2578 = vmatpush1.bf16.msra.mxu0 0
  %2579 = vmatprep.subr.bf16.mxu0 0
  %2580 = vmatpush1.bf16.msra.mxu0 0
  %2581 = vmatprep.subr.bf16.mxu0 0
  %2582 = vmatpush1.bf16.msra.mxu0 0
  %2583 = vmatprep.subr.bf16.mxu0 0
  %2584 = vmatpush1.bf16.msra.mxu0 0
  %2585 = vmatprep.subr.bf16.mxu0 0
  %2586 = vmatpush1.bf16.msra.mxu0 0
  %2587 = vmatprep.subr.bf16.mxu0 0
  %2588 = vmatpush1.bf16.msra.mxu0 0
  %2589 = vmatprep.subr.bf16.mxu0 0
  %2590 = vmatpush1.bf16.msra.mxu0 0
  %2591 = vmatprep.subr.bf16.mxu0 0
  %2592 = vmatpush1.bf16.msra.mxu0 0
  %2593 = vmatprep.mubr.bf16.mxu0 0
  %2594 = vmatmul.mubr.bf16.gmra.mrb[0].mxu0 %v2489
  %v2595 = vpop.f32.mrb[0].mxu0
  %v2596 = vadd.f32 %v2511, %v2595
  %v2597 = vpop.f32.mrb[0].mxu0
  %v2598 = vpop.f32.mrb[0].mxu0
  %v2599 = vpop.f32.mrb[0].mxu0
  %2600 = vdwg.mxu0
  %2601 = vst [vmem:[%s16] sm:$0xff] %v2596
  // Predicated region
  $region66: #{run.1} parent=0 // pred_check
    _
  $region67: #{run.1} parent=0 // pred_check_branch
    %2603 = sbr.rel (0) target = $region69
  $region68: #{run.1} parent=0 // pred_region
    _
  $region69: #{run.1} parent=0 // pred_fallthru
    _
  // Predicated region
  $region70: #{run.1} parent=0 // pred_check
    _
  $region71: #{run.1} parent=0 // pred_check_branch
    %2605 = sbr.rel (0) target = $region73
  $region72: #{run.1} parent=0 // pred_region
    _
  $region73: #{run.1} parent=0 // pred_fallthru
    _

</llo_original>
